<compile_context>
chip_gen: v7x
topology: tpu7x:2x2x1
jax: 0.10.0
libtpu: 0.0.40
codegen_flags: <defaults>
</compile_context>

<pallas_src>
import jax
import jax.numpy as jnp
from jax import lax
from jax.experimental import pallas as pl
from jax.experimental.pallas import tpu as pltpu


def _round_up(x, m):
    return (x + m - 1) // m * m


def _pick_m_tile(M, *, cap=1024, mult=16, pref_steps=4, min_steps=2):
    """Largest tile (multiple of `mult`, <= cap) that divides M, preferring a
    grid of >= pref_steps (then >= min_steps) steps so v7x's two TensorCores
    both get work.  Falls back to padding M only if no aligned divisor exists."""
    divisors = [t for t in range(mult, min(cap, M) + 1, mult) if M % t == 0]
    for steps in (pref_steps, min_steps, 1):
        cands = [t for t in divisors if M // t >= steps]
        if cands:
            return max(cands), M
    tm = min(cap, _round_up(M, mult))
    return tm, _round_up(M, tm)


def _pick_batch_tile(B, *, cap=256, mult=8):
    """Largest multiple-of-8 divisor of B (<= cap); small batches use one
    full-batch block (block dim == full dim is always legal)."""
    best = None
    for t in range(mult, min(cap, B) + 1, mult):
        if B % t == 0:
            best = t
    if best is not None:
        return best
    # TODO(synk): very large batches with no multiple-of-8 divisor would want
    # batch padding; not needed for this module's usage.
    return B


def _pick_k_tile(K, *, cap=4096, mult=128):
    """Largest multiple-of-128 divisor of K (<= cap); bounds the streamed
    classifier-weight block to <= cap*128*2 bytes (1 MiB at cap=4096)."""
    best = mult
    for t in range(mult, min(cap, K) + 1, mult):
        if K % t == 0:
            best = t
    return best


# ----------------------------------------------------------------------------
# Kernel 1: im2col-matmul + fused ReLU   (patches @ w_t -> relu)
#   patches: (Mpad, Kpad) bf16   w_t: (Kpad, 128) bf16   out: (Mpad, 128) bf16
# ----------------------------------------------------------------------------
def conv_matmul_relu_kernel(p_ref, w_ref, o_ref):
    acc = jnp.dot(p_ref[...], w_ref[...], preferred_element_type=jnp.float32)
    o_ref[...] = jnp.maximum(acc, 0.0).astype(o_ref.dtype)


def conv_relu_pallas(patches, w_t, *, tm):
    M, K = patches.shape
    _, N = w_t.shape
    assert M % tm == 0 and K % 128 == 0 and N % 128 == 0
    return pl.pallas_call(
        conv_matmul_relu_kernel,
        out_shape=jax.ShapeDtypeStruct((M, N), jnp.bfloat16),
        grid_spec=pltpu.PrefetchScalarGridSpec(
            num_scalar_prefetch=0,
            grid=(M // tm,),
            in_specs=[
                pl.BlockSpec((tm, K), lambda i: (i, 0)),
                pl.BlockSpec((K, N), lambda i: (0, 0)),   # weight stays resident
            ],
            out_specs=pl.BlockSpec((tm, N), lambda i: (i, 0)),
        ),
        compiler_params=pltpu.CompilerParams(
            dimension_semantics=("parallel",),
            vmem_limit_bytes=32 * 1024 * 1024),
    )(patches, w_t)


# ----------------------------------------------------------------------------
# Kernel 2: classifier Linear:  x @ w + b
#   (the classifier's ReLU is a no-op here: conv output is already >= 0)
#   Batch axis is "parallel" (tb rows), K axis is an "arbitrary" reduction with
#   an f32 VMEM accumulator; bias added and stored at the last K step.
#   x: (B, K2) bf16   w: (K2, Npad) bf16   b: (1, Npad) f32   out: (B, Npad) f32
# ----------------------------------------------------------------------------
def linear_kernel(x_ref, w_ref, b_ref, o_ref, acc_ref):
    k = pl.program_id(1)

    @pl.when(k == 0)
    def _():
        acc_ref[...] = jnp.zeros_like(acc_ref)

    acc_ref[...] += jnp.dot(x_ref[...], w_ref[...],
                            preferred_element_type=jnp.float32)

    @pl.when(k == pl.num_programs(1) - 1)
    def _():
        o_ref[...] = (acc_ref[...] + b_ref[...]).astype(o_ref.dtype)


def linear_pallas(x, w, b2d, *, tb, tk):
    B, K = x.shape
    _, N = w.shape
    assert B % tb == 0 and K % tk == 0
    assert tk % 128 == 0 and N % 128 == 0
    return pl.pallas_call(
        linear_kernel,
        out_shape=jax.ShapeDtypeStruct((B, N), jnp.float32),
        grid_spec=pltpu.PrefetchScalarGridSpec(
            num_scalar_prefetch=0,
            grid=(B // tb, K // tk),
            in_specs=[
                pl.BlockSpec((tb, tk), lambda i, k: (i, k)),
                pl.BlockSpec((tk, N), lambda i, k: (k, 0)),
                pl.BlockSpec((1, N), lambda i, k: (0, 0)),
            ],
            out_specs=pl.BlockSpec((tb, N), lambda i, k: (i, 0)),
            scratch_shapes=[pltpu.VMEM((tb, N), jnp.float32)],
        ),
        compiler_params=pltpu.CompilerParams(
            dimension_semantics=("parallel", "arbitrary"),
            vmem_limit_bytes=32 * 1024 * 1024),
    )(x, w, b2d)


# ----------------------------------------------------------------------------
# One-time weight preparation (hoisted off the forward path).
# ----------------------------------------------------------------------------
def prepare_params(conv_w, fc_w, fc_b, *, Ho, Wo, num_classes):
    Cout, Cin, KH, KW = conv_w.shape
    K = Cin * KH * KW                       # 363
    Kpad = _round_up(K, 128)                # 384 (128-aligned contraction)
    Cpad = _round_up(Cout, 128)             # 128 (lane-dense conv output)
    Npad = _round_up(num_classes, 128)      # 128 (lane-dense logits)

    # conv weight: (Cout, C*11*11) -> (Kpad, Cpad), zero-padded, bf16
    w_t = conv_w.reshape(Cout, K).T
    w_t = jnp.pad(w_t, ((0, Kpad - K), (0, Cpad - Cout))).astype(jnp.bfloat16)

    # fc weight: PyTorch NCHW-flatten order -> (h, w, c_padded) order so it
    # matches the conv kernel's (b, ho, wo, c) activation layout with no
    # activation transpose.  Zero channel/class padding absorbed here.
    # (~25% of the rows are zeros from Cpad — accepted cost of the lane-dense
    # conv store.)
    w2 = fc_w.reshape(num_classes, Cout, Ho, Wo)
    w2 = jnp.transpose(w2, (0, 2, 3, 1))                               # (N,Ho,Wo,C)
    w2 = jnp.pad(w2, ((0, Npad - num_classes), (0, 0), (0, 0), (0, Cpad - Cout)))
    w2 = w2.reshape(Npad, Ho * Wo * Cpad).T.astype(jnp.bfloat16)       # (K2, Npad)
    b2 = jnp.pad(fc_b, (0, Npad - num_classes)).reshape(1, Npad).astype(jnp.float32)
    return w_t, w2, b2


# ----------------------------------------------------------------------------
# Full forward
# ----------------------------------------------------------------------------
def alexnet_forward(x, conv_w_t, fc_w_t, fc_b2d, *, num_classes):
    B, C, H, W = x.shape
    Kpad, Cpad = conv_w_t.shape             # (384, 128)

    # ---- feature_extraction: Conv2d(bias=False) + ReLU (Pallas matmul) ----
    xb = x.astype(jnp.bfloat16)
    Ho = (H + 2 * 2 - 11) // 4 + 1
    Wo = (W + 2 * 2 - 11) // 4 + 1
    # NHWC patch layout straight from XLA (no separate transpose pass);
    # feature index = c*KH*KW + kh*KW + kw, matching PyTorch's weight reshape.
    patches = lax.conv_general_dilated_patches(
        xb, filter_shape=(11, 11), window_strides=(4, 4),
        padding=((2, 2), (2, 2)),
        dimension_numbers=("NCHW", "OIHW", "NHWC"))      # (B, Ho, Wo, C*11*11)
    K = patches.shape[-1]
    M = B * Ho * Wo
    patches = patches.reshape(M, K)

    tm, Mpad = _pick_m_tile(M)
    # Single pad op: K 363->384; M is padded only if no aligned divisor exists.
    patches = jnp.pad(patches, ((0, Mpad - M), (0, Kpad - K)))

    conv_out = conv_relu_pallas(patches, conv_w_t, tm=tm)   # (Mpad, Cpad) bf16
    if Mpad != M:
        conv_out = conv_out[:M]

    # flatten in (ho, wo, c_padded) order; the NCHW .view() ordering is folded
    # into fc_w_t at prepare time, so no activation transpose is needed here.
    feat = conv_out.reshape(B, Ho * Wo * Cpad)

    # ---- classifier: ReLU (no-op) + Linear (batch-parallel, K-reduction) ----
    K2 = feat.shape[1]
    assert fc_w_t.shape[0] == K2, (
        "fc weight was prepared for a different input resolution")
    tb = _pick_batch_tile(B)
    tk = _pick_k_tile(K2)
    logits = linear_pallas(feat, fc_w_t, fc_b2d, tb=tb, tk=tk)   # (B, Npad) f32
    return logits[:, :num_classes]


if __name__ == "__main__":
    B, C, H, W = 2, 3, 35, 35           # conv out: (2, 96, 8, 8) -> flat 6144
    num_classes = 11
    Ho = Wo = (H + 2 * 2 - 11) // 4 + 1  # = 8
    flat = 96 * Ho * Wo                  # = 6144

    key = jax.random.PRNGKey(0)
    kx, kw1, kw2, kb2 = jax.random.split(key, 4)
    x = jax.random.normal(kx, (B, C, H, W), dtype=jnp.float32)
    conv_w = jax.random.normal(kw1, (96, 3, 11, 11), dtype=jnp.float32) * 0.05
    fc_w = jax.random.normal(kw2, (num_classes, flat), dtype=jnp.float32) * 0.02
    fc_b = jax.random.normal(kb2, (num_classes,), dtype=jnp.float32) * 0.01

    # one-time weight prep (off the per-forward path)
    conv_w_t, fc_w_t, fc_b2d = prepare_params(
        conv_w, fc_w, fc_b, Ho=Ho, Wo=Wo, num_classes=num_classes)

    fwd = jax.jit(alexnet_forward, static_argnames=("num_classes",))
    out = fwd(x, conv_w_t, fc_w_t, fc_b2d, num_classes=num_classes)
    jax.block_until_ready(out)
    assert out.shape == (B, num_classes)
    print("KERNEL_OK")
</pallas_src>

<mosaic_0001>
module attributes {stable_mosaic.version = 11 : i64} {
  func.func @conv_matmul_relu_kernel(%arg0: i32, %arg1: memref<32x384xbf16, #tpu.memory_space<vmem>>, %arg2: memref<384x128xbf16, #tpu.memory_space<vmem>>, %arg3: memref<32x128xbf16, #tpu.memory_space<vmem>>) attributes {dimension_semantics = [#tpu.dimension_semantics<parallel>], iteration_bounds = array<i64: 4>, scalar_prefetch = 0 : i64, scratch_operands = 0 : i64, tpu.core_type = #tpu.core_type<tc>, window_params = [{transform_indices = @transform_0, window_bounds = array<i64: 32, 384>}, {pipeline_mode = #tpu.pipeline_mode<synchronous>, transform_indices = @transform_1, window_bounds = array<i64: 384, 128>}, {transform_indices = @transform_2, window_bounds = array<i64: 32, 128>}]} {
    %c0 = arith.constant 0 : index
    %c0_0 = arith.constant 0 : index
    %0 = vector.load %arg1[%c0, %c0_0] : memref<32x384xbf16, #tpu.memory_space<vmem>>, vector<32x384xbf16>
    %c0_1 = arith.constant 0 : index
    %c0_2 = arith.constant 0 : index
    %1 = vector.load %arg2[%c0_1, %c0_2] : memref<384x128xbf16, #tpu.memory_space<vmem>>, vector<384x128xbf16>
    %cst = arith.constant dense<0.000000e+00> : vector<32x128xf32>
    %2 = tpu.matmul %0, %1, %cst {dimension_numbers = #tpu.dot_dimension_numbers<[1], [0], [0], [1], [0, 0, 1, 1], [], []>} : vector<32x384xbf16>, vector<384x128xbf16>, vector<32x128xf32> -> vector<32x128xf32>
    %cst_3 = arith.constant 0.000000e+00 : f32
    %3 = vector.broadcast %cst_3 : f32 to vector<32x128xf32>
    %4 = arith.maximumf %2, %3 : vector<32x128xf32>
    %5 = arith.truncf %4 : vector<32x128xf32> to vector<32x128xbf16>
    %c0_4 = arith.constant 0 : index
    %c0_5 = arith.constant 0 : index
    %6 = vector.load %arg3[%c0_4, %c0_5] : memref<32x128xbf16, #tpu.memory_space<vmem>>, vector<32x128xbf16>
    tpu.vector_store %arg3[%c0_4, %c0_5], %5 {strides = array<i32>} : memref<32x128xbf16, #tpu.memory_space<vmem>>, vector<32x128xbf16>,
    return
  }
  func.func @transform_0(%arg0: i32) -> (i32, i32) {
    %c0_i32 = arith.constant 0 : i32
    %c0_i32_0 = arith.constant 0 : i32
    return %arg0, %c0_i32 : i32, i32
  }
  func.func @transform_1(%arg0: i32) -> (i32, i32) {
    %c0_i32 = arith.constant 0 : i32
    %c0_i32_0 = arith.constant 0 : i32
    %c0_i32_1 = arith.constant 0 : i32
    return %c0_i32, %c0_i32_0 : i32, i32
  }
  func.func @transform_2(%arg0: i32) -> (i32, i32) {
    %c0_i32 = arith.constant 0 : i32
    %c0_i32_0 = arith.constant 0 : i32
    return %arg0, %c0_i32 : i32, i32
  }
}

module attributes {stable_mosaic.version = 11 : i64} {
  func.func @linear_kernel(%arg0: i32, %arg1: i32, %arg2: memref<2x4096xbf16, #tpu.memory_space<vmem>>, %arg3: memref<4096x128xbf16, #tpu.memory_space<vmem>>, %arg4: memref<1x128xf32, #tpu.memory_space<vmem>>, %arg5: memref<2x128xf32, #tpu.memory_space<vmem>>, %arg6: memref<2x128xf32, #tpu.memory_space<vmem>>) attributes {dimension_semantics = [#tpu.dimension_semantics<parallel>, #tpu.dimension_semantics<arbitrary>], iteration_bounds = array<i64: 1, 2>, scalar_prefetch = 0 : i64, scratch_operands = 1 : i64, tpu.core_type = #tpu.core_type<tc>, window_params = [{transform_indices = @transform_0, window_bounds = array<i64: 2, 4096>}, {transform_indices = @transform_1, window_bounds = array<i64: 4096, 128>}, {pipeline_mode = #tpu.pipeline_mode<synchronous>, transform_indices = @transform_2, window_bounds = array<i64: 1, 128>}, {transform_indices = @transform_3, window_bounds = array<i64: 2, 128>}]} {
    %c0_i32 = arith.constant 0 : i32
    %0 = arith.cmpi eq, %arg1, %c0_i32 : i32
    %1 = arith.extui %0 : i1 to i32
    %c0_i32_0 = arith.constant 0 : i32
    %2 = arith.cmpi ne, %1, %c0_i32_0 : i32
    scf.if %2 {
      %cst_9 = arith.constant 0.000000e+00 : f32
      %12 = vector.broadcast %cst_9 : f32 to vector<2x128xf32>
      %c0_10 = arith.constant 0 : index
      %c0_11 = arith.constant 0 : index
      %13 = vector.load %arg6[%c0_10, %c0_11] : memref<2x128xf32, #tpu.memory_space<vmem>>, vector<2x128xf32>
      tpu.vector_store %arg6[%c0_10, %c0_11], %12 {strides = array<i32>} : memref<2x128xf32, #tpu.memory_space<vmem>>, vector<2x128xf32>,
    } else {
    }
    %c0 = arith.constant 0 : index
    %c0_1 = arith.constant 0 : index
    %3 = vector.load %arg6[%c0, %c0_1] : memref<2x128xf32, #tpu.memory_space<vmem>>, vector<2x128xf32>
    %c0_2 = arith.constant 0 : index
    %c0_3 = arith.constant 0 : index
    %4 = vector.load %arg2[%c0_2, %c0_3] : memref<2x4096xbf16, #tpu.memory_space<vmem>>, vector<2x4096xbf16>
    %c0_4 = arith.constant 0 : index
    %c0_5 = arith.constant 0 : index
    %5 = vector.load %arg3[%c0_4, %c0_5] : memref<4096x128xbf16, #tpu.memory_space<vmem>>, vector<4096x128xbf16>
    %cst = arith.constant dense<0.000000e+00> : vector<2x128xf32>
    %6 = tpu.matmul %4, %5, %cst {dimension_numbers = #tpu.dot_dimension_numbers<[1], [0], [0], [1], [0, 0, 1, 1], [], []>} : vector<2x4096xbf16>, vector<4096x128xbf16>, vector<2x128xf32> -> vector<2x128xf32>
    %7 = arith.addf %3, %6 : vector<2x128xf32>
    %c0_6 = arith.constant 0 : index
    %c0_7 = arith.constant 0 : index
    %8 = vector.load %arg6[%c0_6, %c0_7] : memref<2x128xf32, #tpu.memory_space<vmem>>, vector<2x128xf32>
    tpu.vector_store %arg6[%c0_6, %c0_7], %7 {strides = array<i32>} : memref<2x128xf32, #tpu.memory_space<vmem>>, vector<2x128xf32>,
    %c1_i32 = arith.constant 1 : i32
    %9 = arith.cmpi eq, %arg1, %c1_i32 : i32
    %10 = arith.extui %9 : i1 to i32
    %c0_i32_8 = arith.constant 0 : i32
    %11 = arith.cmpi ne, %10, %c0_i32_8 : i32
    scf.if %11 {
      %c0_9 = arith.constant 0 : index
      %c0_10 = arith.constant 0 : index
      %12 = vector.load %arg6[%c0_9, %c0_10] : memref<2x128xf32, #tpu.memory_space<vmem>>, vector<2x128xf32>
      %c0_11 = arith.constant 0 : index
      %c0_12 = arith.constant 0 : index
      %13 = vector.load %arg4[%c0_11, %c0_12] : memref<1x128xf32, #tpu.memory_space<vmem>>, vector<1x128xf32>
      %14 = vector.broadcast %13 : vector<1x128xf32> to vector<2x128xf32>
      %15 = arith.addf %12, %14 : vector<2x128xf32>
      %c0_13 = arith.constant 0 : index
      %c0_14 = arith.constant 0 : index
      %16 = vector.load %arg5[%c0_13, %c0_14] : memref<2x128xf32, #tpu.memory_space<vmem>>, vector<2x128xf32>
      tpu.vector_store %arg5[%c0_13, %c0_14], %15 {strides = array<i32>} : memref<2x128xf32, #tpu.memory_space<vmem>>, vector<2x128xf32>,
    } else {
    }
    return
  }
  func.func @transform_0(%arg0: i32, %arg1: i32) -> (i32, i32) {
    %c0_i32 = arith.constant 0 : i32
    return %arg0, %arg1 : i32, i32
  }
  func.func @transform_1(%arg0: i32, %arg1: i32) -> (i32, i32) {
    %c0_i32 = arith.constant 0 : i32
    %c0_i32_0 = arith.constant 0 : i32
    return %arg1, %c0_i32 : i32, i32
  }
  func.func @transform_2(%arg0: i32, %arg1: i32) -> (i32, i32) {
    %c0_i32 = arith.constant 0 : i32
    %c0_i32_0 = arith.constant 0 : i32
    %c0_i32_1 = arith.constant 0 : i32
    return %c0_i32, %c0_i32_0 : i32, i32
  }
  func.func @transform_3(%arg0: i32, %arg1: i32) -> (i32, i32) {
    %c0_i32 = arith.constant 0 : i32
    %c0_i32_0 = arith.constant 0 : i32
    return %arg0, %c0_i32 : i32, i32
  }
}

</mosaic_0001>

<llo_original>
// kernel: alexnet_forward.2
$region0: #{alexnet_forward.2}
  #allocation0 [shape = 'u32[]', space=smem, size = 0x4, offset = 0x4, fixed_abs, tag = 'smem constant byte address 0x4 - core index']
  #allocation1 [shape = 'u32[144,128]{1,0:T(1,128)}', space=vmem, size = 0x12000, scoped, tag = 'internal scratch']
  %s0 = inlined_call_operand.vmem [shape: bf16[128,384], index: 0, kind: input, shape index: {}]
  %s1 = inlined_call_operand.vmem [shape: bf16[384,128], index: 1, kind: input, shape index: {}]
  %s2 = inlined_call_operand.vmem [shape: bf16[128,128], index: 2, kind: output, shape index: {}]
  %s3 = sld [smem:[#allocation0]]
  $region41: #{alexnet_forward.2} parent=0
    _
  %s5 = ssub.s32 1, %s3
  %s6 = scalar_select 0, %s5, %s3
  loop: start=0, step=1, limit=6
  $region2: #{alexnet_forward.2} parent=0 // loop_pre_header
    _
  $region3: #{alexnet_forward.2} parent=0 // loop_header
    %s8 = sphi 0, %s12
    %p9 = scmp.ge.s32.totalorder %s8, 6
    %s18 = sphi 0, %s20
    %s21 = sphi 0, %s18
    %s22 = sphi 0, %s21
    %s38 = sphi 0, %s22
    %s42 = sphi 0, %s42
    %s44 = sphi 0, %s42
    %s45 = sphi 0, %s44
    %s59 = sphi 0, %s45
    %s65 = sphi 0, %s67
    %s68 = sphi 0, %s65
    %s69 = sphi 0, %s68
    %s85 = sphi 0, %s69
  $region4: #{alexnet_forward.2} parent=0 // loop_header_branch
    %11 = sbr.rel (%p9) target = $region8
  $region5: #{alexnet_forward.2} parent=0 // loop_body
    %s13 = ssub.s32 %s8, 1
    %s14 = ssub.s32 %s8, 2
    %s15 = sadd.s32 %s8, 1
    %s16 = ssub.s32 %s8, %s15
    %p17 = scmp.eq.s32.totalorder %s16, 0
    %s19 = sadd.s32 %s18, 1
    %s20 = scalar_select %p17, %s18, %s19
    %p23 = pneg %p17
    %p24 = scmp.eq.s32.totalorder %s8, 3
    %p25 = por %p23, %p24
    %p26 = scmp.ne.s32.totalorder %s18, %s21
    %p27 = scmp.eq.s32.totalorder %s8, 0
    %p28 = por %p26, %p27
    %p29 = scmp.ne.s32.totalorder %s18, %s21
    %p30 = scmp.eq.s32.totalorder %s13, 3
    %p31 = por %p29, %p30
    %p32 = scmp.ne.s32.totalorder %s21, %s22
    %p33 = scmp.eq.s32.totalorder %s13, 0
    %p34 = por %p32, %p33
    %p35 = scmp.ne.s32.totalorder %s21, %s22
    %p36 = scmp.eq.s32.totalorder %s14, 3
    %p37 = por %p35, %p36
    %p39 = scmp.ne.s32.totalorder %s22, %s38
    %p40 = scmp.eq.s32.totalorder %s14, 0
    %p41 = por %p39, %p40
    %s43 = sadd.s32 %s42, 1
    %p46 = scmp.eq.s32.totalorder %s8, 3
    %p47 = scmp.ne.s32.totalorder %s42, %s44
    %p48 = scmp.eq.s32.totalorder %s8, 0
    %p49 = por %p47, %p48
    %p50 = scmp.ne.s32.totalorder %s42, %s44
    %p51 = scmp.eq.s32.totalorder %s13, 3
    %p52 = por %p50, %p51
    %p53 = scmp.ne.s32.totalorder %s44, %s45
    %p54 = scmp.eq.s32.totalorder %s13, 0
    %p55 = por %p53, %p54
    %p56 = scmp.ne.s32.totalorder %s44, %s45
    %p57 = scmp.eq.s32.totalorder %s14, 3
    %p58 = por %p56, %p57
    %p60 = scmp.ne.s32.totalorder %s45, %s59
    %p61 = scmp.eq.s32.totalorder %s14, 0
    %p62 = por %p60, %p61
    %s63 = ssub.s32 %s8, %s15
    %p64 = scmp.eq.s32.totalorder %s63, 0
    %s66 = sadd.s32 %s65, 1
    %s67 = scalar_select %p64, %s65, %s66
    %p70 = pneg %p64
    %p71 = scmp.eq.s32.totalorder %s8, 3
    %p72 = por %p70, %p71
    %p73 = scmp.ne.s32.totalorder %s65, %s68
    %p74 = scmp.eq.s32.totalorder %s8, 0
    %p75 = por %p73, %p74
    %p76 = scmp.ne.s32.totalorder %s65, %s68
    %p77 = scmp.eq.s32.totalorder %s13, 3
    %p78 = por %p76, %p77
    %p79 = scmp.ne.s32.totalorder %s68, %s69
    %p80 = scmp.eq.s32.totalorder %s13, 0
    %p81 = por %p79, %p80
    %p82 = scmp.ne.s32.totalorder %s68, %s69
    %p83 = scmp.eq.s32.totalorder %s14, 3
    %p84 = por %p82, %p83
    %p86 = scmp.ne.s32.totalorder %s69, %s85
    %p87 = scmp.eq.s32.totalorder %s14, 0
    %p88 = por %p86, %p87
    %p89 = scmp.le.s32.totalorder 1, %s8
    %p90 = scmp.lt.s32.totalorder %s8, 5
    %p91 = pnand %p89, %p90
    %p92 = pneg %p91
    // Predicated region
    $region9: #{alexnet_forward.2} parent=5 // pred_check
      _
    $region10: #{alexnet_forward.2} parent=5 // pred_check_branch
      %94 = sbr.rel (%p91) target = $region12
    $region11: #{alexnet_forward.2} parent=5 // pred_region
      %s95 = ssub.s32 %s8, 1
      // Predicated region
      $region13: #{alexnet_forward.2} parent=11 // pred_check
        %p96 = pneg %p55
      $region14: #{alexnet_forward.2} parent=11 // pred_check_branch
        %98 = sbr.rel (%p96) target = $region16
      $region15: #{alexnet_forward.2} parent=11 // pred_region
        _
      $region16: #{alexnet_forward.2} parent=11 // pred_fallthru
        _
    $region12: #{alexnet_forward.2} parent=5 // pred_fallthru
      _
    %p99 = scmp.lt.s32.totalorder %s8, 4
    // Predicated region
    $region17: #{alexnet_forward.2} parent=5 // pred_check
      %p100 = pneg %p99
    $region18: #{alexnet_forward.2} parent=5 // pred_check_branch
      %102 = sbr.rel (%p100) target = $region20
    $region19: #{alexnet_forward.2} parent=5 // pred_region
      // Predicated region
      $region21: #{alexnet_forward.2} parent=19 // pred_check
        %p103 = pneg %p28
      $region22: #{alexnet_forward.2} parent=19 // pred_check_branch
        %105 = sbr.rel (%p103) target = $region24
      $region23: #{alexnet_forward.2} parent=19 // pred_region
        %s106 = smul.u32 4, %s8
        %p107 = scmp.lt.s32.totalorder %s106, 15
        %s108 = scalar_select %p107, %s106, 15
        %s109 = smul.addr %s108, 3
        %s110 = smul.addr %s109, 4
        %s111 = scalar_lea.vmem %s0, %s110
        %s112 = smul.u32 4, %s8
      $region24: #{alexnet_forward.2} parent=19 // pred_fallthru
        _
    $region20: #{alexnet_forward.2} parent=5 // pred_fallthru
      _
    %p113 = scmp.le.s32.totalorder 1, %s8
    %p114 = scmp.lt.s32.totalorder %s8, 5
    %p115 = pnand %p113, %p114
    %p116 = pneg %p115
    // Predicated region
    $region25: #{alexnet_forward.2} parent=5 // pred_check
      _
    $region26: #{alexnet_forward.2} parent=5 // pred_check_branch
      %118 = sbr.rel (%p115) target = $region28
    $region27: #{alexnet_forward.2} parent=5 // pred_region
      %s119 = ssub.s32 %s8, 1
      %s120 = smul.u32 4, %s13
      %p121 = scmp.lt.s32.totalorder %s120, 15
      %s122 = scalar_select %p121, %s120, 15
      %s123 = smul.addr %s122, 3
      %s124 = smul.addr %s123, 4
      %s125 = scalar_lea.vmem %s0, %s124
      %p126 = pneg %p34
      %p127 = pneg %p31
      %p128 = pneg %p55
      %p129 = pneg %p52
      %p130 = pneg %p81
      %p131 = pneg %p78
      %s132 = smul.u32 4, %s13
      %p133 = scmp.lt.s32.totalorder %s132, 15
      %s134 = scalar_select %p133, %s132, 15
      %s135 = smul.addr %s134, 4
      %s136 = scalar_lea.vmem %s2, %s135
      %s137 = smul.u32 4, %s13
      %p138 = scmp.lt.s32.totalorder %s137, 15
      %s139 = scalar_select %p138, %s137, 15
      %s140 = smul.addr %s139, 3
      %s141 = smul.addr %s140, 4
      %s142 = scalar_lea.vmem %s0, %s141
      %s143 = smul.u32 4, %s13
      %s144 = smul.u32 4, %s13
      %p145 = scmp.lt.s32.totalorder %s144, 15
      %s146 = scalar_select %p145, %s144, 15
      %s147 = smul.addr %s146, 4
      %s148 = scalar_lea.vmem %s2, %s147
      %s149 = smul.u32 4, %s13
      %v151 = vld [vmem:[%s142] sm:$0xff]
      %v152 = vld [vmem:[%s142 + $0x8] sm:$0xf]
      %v153 = vld [vmem:[%s142 + $0xc] sm:$0xff]
      %v154 = vld [vmem:[%s142 + $0x14] sm:$0xf]
      %v155 = vld [vmem:[%s142 + $0x18] sm:$0xff]
      %v156 = vld [vmem:[%s142 + $0x20] sm:$0xf]
      %v157 = vld [vmem:[%s142 + $0x24] sm:$0xff]
      %v158 = vld [vmem:[%s142 + $0x2c] sm:$0xf]
      %v159 = vld [vmem:[%s1] sm:$0xf]
      %v160 = vld [vmem:[%s1 + $0x4] sm:$0xf]
      %v161 = vld [vmem:[%s1 + $0x8] sm:$0xf]
      %v162 = vld [vmem:[%s1 + $0xc] sm:$0xf]
      %v163 = vld [vmem:[%s1 + $0x10] sm:$0xf]
      %v164 = vld [vmem:[%s1 + $0x14] sm:$0xf]
      %v165 = vld [vmem:[%s1 + $0x18] sm:$0xf]
      %v166 = vld [vmem:[%s1 + $0x1c] sm:$0xf]
      %v167 = vld [vmem:[%s1 + $0x20] sm:$0xf]
      %v168 = vld [vmem:[%s1 + $0x24] sm:$0xf]
      %v169 = vld [vmem:[%s1 + $0x28] sm:$0xf]
      %v170 = vld [vmem:[%s1 + $0x2c] sm:$0xf]
      %v171 = vld [vmem:[%s1 + $0x30] sm:$0xf]
      %v172 = vld [vmem:[%s1 + $0x34] sm:$0xf]
      %v173 = vld [vmem:[%s1 + $0x38] sm:$0xf]
      %v174 = vld [vmem:[%s1 + $0x3c] sm:$0xf]
      %v175 = vld [vmem:[%s1 + $0x40] sm:$0xf]
      %v176 = vld [vmem:[%s1 + $0x44] sm:$0xf]
      %v177 = vld [vmem:[%s1 + $0x48] sm:$0xf]
      %v178 = vld [vmem:[%s1 + $0x4c] sm:$0xf]
      %v179 = vld [vmem:[%s1 + $0x50] sm:$0xf]
      %v180 = vld [vmem:[%s1 + $0x54] sm:$0xf]
      %v181 = vld [vmem:[%s1 + $0x58] sm:$0xf]
      %v182 = vld [vmem:[%s1 + $0x5c] sm:$0xf]
      %v183 = vld [vmem:[%s1 + $0x60] sm:$0xf]
      %v184 = vld [vmem:[%s1 + $0x64] sm:$0xf]
      %v185 = vld [vmem:[%s1 + $0x68] sm:$0xf]
      %v186 = vld [vmem:[%s1 + $0x6c] sm:$0xf]
      %v187 = vld [vmem:[%s1 + $0x70] sm:$0xf]
      %v188 = vld [vmem:[%s1 + $0x74] sm:$0xf]
      %v189 = vld [vmem:[%s1 + $0x78] sm:$0xf]
      %v190 = vld [vmem:[%s1 + $0x7c] sm:$0xf]
      %v191 = vld [vmem:[%s1 + $0x80] sm:$0xf]
      %v192 = vld [vmem:[%s1 + $0x84] sm:$0xf]
      %v193 = vld [vmem:[%s1 + $0x88] sm:$0xf]
      %v194 = vld [vmem:[%s1 + $0x8c] sm:$0xf]
      %v195 = vld [vmem:[%s1 + $0x90] sm:$0xf]
      %v196 = vld [vmem:[%s1 + $0x94] sm:$0xf]
      %v197 = vld [vmem:[%s1 + $0x98] sm:$0xf]
      %v198 = vld [vmem:[%s1 + $0x9c] sm:$0xf]
      %v199 = vld [vmem:[%s1 + $0xa0] sm:$0xf]
      %v200 = vld [vmem:[%s1 + $0xa4] sm:$0xf]
      %v201 = vld [vmem:[%s1 + $0xa8] sm:$0xf]
      %v202 = vld [vmem:[%s1 + $0xac] sm:$0xf]
      %v203 = vld [vmem:[%s1 + $0xb0] sm:$0xf]
      %v204 = vld [vmem:[%s1 + $0xb4] sm:$0xf]
      %v205 = vld [vmem:[%s1 + $0xb8] sm:$0xf]
      %v206 = vld [vmem:[%s1 + $0xbc] sm:$0xf]
      %v215 = vunpack.c.l.b16 %v151
      %v216 = vunpack.c.h.b16 %v151
      %v217 = vunpack.c.l.b16 %v152
      %v218 = vunpack.c.l.b16 %v153
      %v219 = vunpack.c.h.b16 %v153
      %v220 = vunpack.c.l.b16 %v154
      %v221 = vunpack.c.l.b16 %v155
      %v222 = vunpack.c.h.b16 %v155
      %v223 = vunpack.c.l.b16 %v156
      %v224 = vunpack.c.l.b16 %v157
      %v225 = vunpack.c.h.b16 %v157
      %v226 = vunpack.c.l.b16 %v158
      %v227 = vpack.c.b16 %v218, %v215
      %v228 = vpack.c.b16 %v219, %v216
      %v229 = vpack.c.b16 %v220, %v217
      %v230 = vpack.c.b16 %v224, %v221
      %v231 = vpack.c.b16 %v225, %v222
      %v232 = vpack.c.b16 %v226, %v223
      %v287 = vunpack.c.l.b16 %v159
      %v288 = vunpack.c.l.b16 %v160
      %v289 = vunpack.c.l.b16 %v161
      %v290 = vunpack.c.l.b16 %v162
      %v291 = vunpack.c.l.b16 %v163
      %v292 = vunpack.c.l.b16 %v164
      %v293 = vunpack.c.l.b16 %v165
      %v294 = vunpack.c.l.b16 %v166
      %v295 = vunpack.c.l.b16 %v167
      %v296 = vunpack.c.l.b16 %v168
      %v297 = vunpack.c.l.b16 %v169
      %v298 = vunpack.c.l.b16 %v170
      %v299 = vunpack.c.l.b16 %v171
      %v300 = vunpack.c.l.b16 %v172
      %v301 = vunpack.c.l.b16 %v173
      %v302 = vunpack.c.l.b16 %v174
      %v303 = vunpack.c.l.b16 %v175
      %v304 = vunpack.c.l.b16 %v176
      %v305 = vunpack.c.l.b16 %v177
      %v306 = vunpack.c.l.b16 %v178
      %v307 = vunpack.c.l.b16 %v179
      %v308 = vunpack.c.l.b16 %v180
      %v309 = vunpack.c.l.b16 %v181
      %v310 = vunpack.c.l.b16 %v182
      %v311 = vunpack.c.l.b16 %v183
      %v312 = vunpack.c.l.b16 %v184
      %v313 = vunpack.c.l.b16 %v185
      %v314 = vunpack.c.l.b16 %v186
      %v315 = vunpack.c.l.b16 %v187
      %v316 = vunpack.c.l.b16 %v188
      %v317 = vunpack.c.l.b16 %v189
      %v318 = vunpack.c.l.b16 %v190
      %v319 = vunpack.c.l.b16 %v191
      %v320 = vunpack.c.l.b16 %v192
      %v321 = vunpack.c.l.b16 %v193
      %v322 = vunpack.c.l.b16 %v194
      %v323 = vunpack.c.l.b16 %v195
      %v324 = vunpack.c.l.b16 %v196
      %v325 = vunpack.c.l.b16 %v197
      %v326 = vunpack.c.l.b16 %v198
      %v327 = vunpack.c.l.b16 %v199
      %v328 = vunpack.c.l.b16 %v200
      %v329 = vunpack.c.l.b16 %v201
      %v330 = vunpack.c.l.b16 %v202
      %v331 = vunpack.c.l.b16 %v203
      %v332 = vunpack.c.l.b16 %v204
      %v333 = vunpack.c.l.b16 %v205
      %v334 = vunpack.c.l.b16 %v206
      %v335 = vpack.c.b16 %v288, %v287
      %v336 = vpack.c.b16 %v290, %v289
      %v337 = vpack.c.b16 %v292, %v291
      %v338 = vpack.c.b16 %v294, %v293
      %v339 = vpack.c.b16 %v296, %v295
      %v340 = vpack.c.b16 %v298, %v297
      %v341 = vpack.c.b16 %v300, %v299
      %v342 = vpack.c.b16 %v302, %v301
      %v343 = vpack.c.b16 %v304, %v303
      %v344 = vpack.c.b16 %v306, %v305
      %v345 = vpack.c.b16 %v308, %v307
      %v346 = vpack.c.b16 %v310, %v309
      %v347 = vpack.c.b16 %v312, %v311
      %v348 = vpack.c.b16 %v314, %v313
      %v349 = vpack.c.b16 %v316, %v315
      %v350 = vpack.c.b16 %v318, %v317
      %v351 = vpack.c.b16 %v320, %v319
      %v352 = vpack.c.b16 %v322, %v321
      %v353 = vpack.c.b16 %v324, %v323
      %v354 = vpack.c.b16 %v326, %v325
      %v355 = vpack.c.b16 %v328, %v327
      %v356 = vpack.c.b16 %v330, %v329
      %v357 = vpack.c.b16 %v332, %v331
      %v358 = vpack.c.b16 %v334, %v333
      %383 = vmatprep.subr.bf16.mxu0 0
      %384 = vmatpush1.bf16.msra.mxu0 %v335
      %385 = vmatprep.subr.bf16.mxu0 0
      %386 = vmatpush1.bf16.msra.mxu0 %v336
      %387 = vmatprep.subr.bf16.mxu0 0
      %388 = vmatpush1.bf16.msra.mxu0 %v337
      %389 = vmatprep.subr.bf16.mxu0 0
      %390 = vmatpush1.bf16.msra.mxu0 %v338
      %391 = vmatprep.subr.bf16.mxu0 0
      %392 = vmatpush1.bf16.msra.mxu0 %v339
      %393 = vmatprep.subr.bf16.mxu0 0
      %394 = vmatpush1.bf16.msra.mxu0 %v340
      %395 = vmatprep.subr.bf16.mxu0 0
      %396 = vmatpush1.bf16.msra.mxu0 %v341
      %397 = vmatprep.subr.bf16.mxu0 0
      %398 = vmatpush1.bf16.msra.mxu0 %v342
      %399 = vmatprep.subr.bf16.mxu0 0
      %400 = vmatpush1.bf16.msra.mxu0 %v343
      %401 = vmatprep.subr.bf16.mxu0 0
      %402 = vmatpush1.bf16.msra.mxu0 %v344
      %403 = vmatprep.subr.bf16.mxu0 0
      %404 = vmatpush1.bf16.msra.mxu0 %v345
      %405 = vmatprep.subr.bf16.mxu0 0
      %406 = vmatpush1.bf16.msra.mxu0 %v346
      %407 = vmatprep.subr.bf16.mxu0 0
      %408 = vmatpush1.bf16.msra.mxu0 %v347
      %409 = vmatprep.subr.bf16.mxu0 0
      %410 = vmatpush1.bf16.msra.mxu0 %v348
      %411 = vmatprep.subr.bf16.mxu0 0
      %412 = vmatpush1.bf16.msra.mxu0 %v349
      %413 = vmatprep.subr.bf16.mxu0 0
      %414 = vmatpush1.bf16.msra.mxu0 %v350
      %415 = vmatprep.mubr.bf16.mxu0 %v228
      %416 = vmatmul.mubr.bf16.gmra.mrb[0].mxu0 %v227
      %v417 = vpop.f32.mrb[0].mxu0
      %v418 = vadd.f32 0.0, %v417
      %v419 = vpop.f32.mrb[0].mxu0
      %v420 = vpop.f32.mrb[0].mxu0
      %v421 = vadd.f32 0.0, %v420
      %v422 = vpop.f32.mrb[0].mxu0
      %423 = vmatprep.mubr.bf16.mxu0 %v231
      %424 = vmatmul.mubr.bf16.gmra.mrb[0].mxu0 %v230
      %v425 = vpop.f32.mrb[0].mxu0
      %v426 = vadd.f32 0.0, %v425
      %v427 = vpop.f32.mrb[0].mxu0
      %v428 = vpop.f32.mrb[0].mxu0
      %v429 = vadd.f32 0.0, %v428
      %v430 = vpop.f32.mrb[0].mxu0
      %431 = vdwg.mxu0
      %432 = vmatprep.subr.bf16.mxu0 0
      %433 = vmatpush1.bf16.msra.mxu0 %v351
      %434 = vmatprep.subr.bf16.mxu0 0
      %435 = vmatpush1.bf16.msra.mxu0 %v352
      %436 = vmatprep.subr.bf16.mxu0 0
      %437 = vmatpush1.bf16.msra.mxu0 %v353
      %438 = vmatprep.subr.bf16.mxu0 0
      %439 = vmatpush1.bf16.msra.mxu0 %v354
      %440 = vmatprep.subr.bf16.mxu0 0
      %441 = vmatpush1.bf16.msra.mxu0 %v355
      %442 = vmatprep.subr.bf16.mxu0 0
      %443 = vmatpush1.bf16.msra.mxu0 %v356
      %444 = vmatprep.subr.bf16.mxu0 0
      %445 = vmatpush1.bf16.msra.mxu0 %v357
      %446 = vmatprep.subr.bf16.mxu0 0
      %447 = vmatpush1.bf16.msra.mxu0 %v358
      %448 = vmatprep.subr.bf16.mxu0 0
      %449 = vmatpush1.bf16.msra.mxu0 0
      %450 = vmatprep.subr.bf16.mxu0 0
      %451 = vmatpush1.bf16.msra.mxu0 0
      %452 = vmatprep.subr.bf16.mxu0 0
      %453 = vmatpush1.bf16.msra.mxu0 0
      %454 = vmatprep.subr.bf16.mxu0 0
      %455 = vmatpush1.bf16.msra.mxu0 0
      %456 = vmatprep.subr.bf16.mxu0 0
      %457 = vmatpush1.bf16.msra.mxu0 0
      %458 = vmatprep.subr.bf16.mxu0 0
      %459 = vmatpush1.bf16.msra.mxu0 0
      %460 = vmatprep.subr.bf16.mxu0 0
      %461 = vmatpush1.bf16.msra.mxu0 0
      %462 = vmatprep.subr.bf16.mxu0 0
      %463 = vmatpush1.bf16.msra.mxu0 0
      %464 = vmatprep.mubr.bf16.mxu0 0
      %465 = vmatmul.mubr.bf16.gmra.mrb[0].mxu0 %v229
      %v466 = vpop.f32.mrb[0].mxu0
      %v467 = vadd.f32 %v418, %v466
      %v468 = vpop.f32.mrb[0].mxu0
      %v469 = vpop.f32.mrb[0].mxu0
      %v470 = vadd.f32 %v421, %v469
      %v471 = vpop.f32.mrb[0].mxu0
      %472 = vmatprep.mubr.bf16.mxu0 0
      %473 = vmatmul.mubr.bf16.gmra.mrb[0].mxu0 %v232
      %v474 = vpop.f32.mrb[0].mxu0
      %v475 = vadd.f32 %v426, %v474
      %v476 = vpop.f32.mrb[0].mxu0
      %v477 = vpop.f32.mrb[0].mxu0
      %v478 = vadd.f32 %v429, %v477
      %v479 = vpop.f32.mrb[0].mxu0
      %480 = vdwg.mxu0
      %v481 = vmax.f32 %v467, 0.0
      %v482 = vmax.f32 %v470, 0.0
      %v483 = vmax.f32 %v475, 0.0
      %v484 = vmax.f32 %v478, 0.0
      %v485 = vpack.c.bf16 %v482, %v481
      %v486 = vpack.c.bf16 %v484, %v483
      %v489 = vunpack.c.l.b16 %v485
      %v490 = vunpack.c.h.b16 %v485
      %v491 = vunpack.c.l.b16 %v486
      %v492 = vunpack.c.h.b16 %v486
      %v493 = vpack.c.b16 %v489, %v489
      %v494 = vpack.c.b16 %v490, %v490
      %v495 = vpack.c.b16 %v491, %v491
      %v496 = vpack.c.b16 %v492, %v492
      %501 = vst [vmem:[%s148] sm:$0xf] %v493
      %502 = vst [vmem:[%s148 + $0x4] sm:$0xf] %v494
      %503 = vst [vmem:[%s148 + $0x8] sm:$0xf] %v495
      %504 = vst [vmem:[%s148 + $0xc] sm:$0xf] %v496
      %s505 = smul.u32 4, %s13
      %p506 = scmp.lt.s32.totalorder %s505, 15
      %s507 = scalar_select %p506, %s505, 15
      %s508 = smul.addr %s507, 4
      %s509 = scalar_lea.vmem %s2, %s508
      // Predicated region
      $region29: #{alexnet_forward.2} parent=27 // pred_check
        %p510 = pneg %p78
      $region30: #{alexnet_forward.2} parent=27 // pred_check_branch
        %512 = sbr.rel (%p510) target = $region32
      $region31: #{alexnet_forward.2} parent=27 // pred_region
        %s513 = smul.u32 4, %s13
      $region32: #{alexnet_forward.2} parent=27 // pred_fallthru
        _
    $region28: #{alexnet_forward.2} parent=5 // pred_fallthru
      _
    %p514 = scmp.le.s32.totalorder 2, %s8
    // Predicated region
    $region33: #{alexnet_forward.2} parent=5 // pred_check
      %p515 = pneg %p514
    $region34: #{alexnet_forward.2} parent=5 // pred_check_branch
      %517 = sbr.rel (%p515) target = $region36
    $region35: #{alexnet_forward.2} parent=5 // pred_region
      %s518 = ssub.s32 %s8, 2
      // Predicated region
      $region37: #{alexnet_forward.2} parent=35 // pred_check
        %p519 = pneg %p84
      $region38: #{alexnet_forward.2} parent=35 // pred_check_branch
        %521 = sbr.rel (%p519) target = $region40
      $region39: #{alexnet_forward.2} parent=35 // pred_region
        %s522 = smul.u32 4, %s14
        %p523 = scmp.lt.s32.totalorder %s522, 15
        %s524 = scalar_select %p523, %s522, 15
        %s525 = smul.addr %s524, 4
        %s526 = scalar_lea.vmem %s2, %s525
      $region40: #{alexnet_forward.2} parent=35 // pred_fallthru
        _
    $region36: #{alexnet_forward.2} parent=5 // pred_fallthru
      _
  $region6: #{alexnet_forward.2} parent=0 // loop_footer
    %s12 = sadd.s32 1, %s8
  $region7: #{alexnet_forward.2} parent=0 // loop_footer_branch
    %7 = sbr.rel target = $region3
  $region8: #{alexnet_forward.2} parent=0 // loop_exit
    _

// kernel: alexnet_forward.3
$region0: #{alexnet_forward.3}
  #allocation0 [shape = 'u32[]', space=smem, size = 0x4, offset = 0x4, fixed_abs, tag = 'smem constant byte address 0x4 - core index']
  #allocation1 [shape = 'u32[144,128]{1,0:T(1,128)}', space=vmem, size = 0x12000, scoped, tag = 'internal scratch']
  #allocation2 [shape = 'f32[2,128]{1,0:T(2,128)}', space=vmem, size = 0x400, scoped, tag = 'scratch operand']
  %s0 = inlined_call_operand.vmem [shape: bf16[2,8192], index: 0, kind: input, shape index: {}]
  %s1 = inlined_call_operand.vmem [shape: bf16[8192,128], index: 1, kind: input, shape index: {}]
  %s2 = inlined_call_operand.vmem [shape: f32[1,128], index: 2, kind: input, shape index: {}]
  %s3 = inlined_call_operand.hbm [shape: f32[2,128], index: 3, kind: output, shape index: {}]
  %s4 = sld [smem:[#allocation0]]
  $region53: #{alexnet_forward.3} parent=0
    _
  %s6 = ssub.s32 1, %s4
  %s7 = scalar_select 0, %s6, %s4
  $region1: #{alexnet_forward.3} parent=0
    #allocation3 [shape = 'u8[1024]{0}', space=vmem, size = 0x400, scoped, tag = 'output window, operand 0, single buffered']
    #allocation4 [shape = 's32[2]{0}', space=sflag, size = 0x8, scoped, tag = 'scoped memory for alexnet_forward.3']
    %8 = vsyncpa [#allocation4], 0
    loop: start=0, step=1, limit=4
    $region2: #{alexnet_forward.3} parent=1 // loop_pre_header
      _
    $region3: #{alexnet_forward.3} parent=1 // loop_header
      %s10 = sphi 0, %s14
      %p11 = scmp.ge.s32.totalorder %s10, 4
      %s17 = sphi 0, %s29
      %s18 = sphi 0, %s25
      %s19 = sphi 0, %s17
      %s20 = sphi 0, %s18
      %s21 = sphi 0, %s19
      %s22 = sphi 0, %s20
      %s34 = sphi 0, %s36
      %s37 = sphi 0, %s34
      %s38 = sphi 0, %s37
      %s54 = sphi 0, %s38
      %s60 = sphi 0, %s62
      %s63 = sphi 0, %s60
      %s64 = sphi 0, %s63
      %s80 = sphi 0, %s64
      %s84 = sphi 0, %s84
      %s86 = sphi 0, %s84
      %s87 = sphi 0, %s86
      %s101 = sphi 0, %s87
      %s107 = sphi 0, %s109
      %s110 = sphi 0, %s107
      %s111 = sphi 0, %s110
      %s127 = sphi 0, %s111
    $region4: #{alexnet_forward.3} parent=1 // loop_header_branch
      %13 = sbr.rel (%p11) target = $region8
    $region5: #{alexnet_forward.3} parent=1 // loop_body
      %s15 = ssub.s32 %s10, 1
      %s16 = ssub.s32 %s10, 2
      %s23 = sadd.s32 1, %s18
      %p24 = scmp.ge.s32.totalorder %s23, 2
      %s25 = scalar_select %p24, 0, %s23
      %s26 = sadd.s32 1, %s17
      %s27 = scalar_select %p24, %s26, %s17
      %p28 = scmp.ge.s32.totalorder %s27, 1
      %s29 = scalar_select %p28, 0, %s27
      %s30 = ssub.s32 %s17, %s29
      %s31 = ssub.s32 %s18, %s25
      %s32 = sor.u32 %s30, %s31
      %p33 = scmp.eq.s32.totalorder %s32, 0
      %s35 = sadd.s32 %s34, 1
      %s36 = scalar_select %p33, %s34, %s35
      %p39 = pneg %p33
      %p40 = scmp.eq.s32.totalorder %s10, 1
      %p41 = por %p39, %p40
      %p42 = scmp.ne.s32.totalorder %s34, %s37
      %p43 = scmp.eq.s32.totalorder %s10, 0
      %p44 = por %p42, %p43
      %p45 = scmp.ne.s32.totalorder %s34, %s37
      %p46 = scmp.eq.s32.totalorder %s15, 1
      %p47 = por %p45, %p46
      %p48 = scmp.ne.s32.totalorder %s37, %s38
      %p49 = scmp.eq.s32.totalorder %s15, 0
      %p50 = por %p48, %p49
      %p51 = scmp.ne.s32.totalorder %s37, %s38
      %p52 = scmp.eq.s32.totalorder %s16, 1
      %p53 = por %p51, %p52
      %p55 = scmp.ne.s32.totalorder %s38, %s54
      %p56 = scmp.eq.s32.totalorder %s16, 0
      %p57 = por %p55, %p56
      %s58 = ssub.s32 %s18, %s25
      %p59 = scmp.eq.s32.totalorder %s58, 0
      %s61 = sadd.s32 %s60, 1
      %s62 = scalar_select %p59, %s60, %s61
      %p65 = pneg %p59
      %p66 = scmp.eq.s32.totalorder %s10, 1
      %p67 = por %p65, %p66
      %p68 = scmp.ne.s32.totalorder %s60, %s63
      %p69 = scmp.eq.s32.totalorder %s10, 0
      %p70 = por %p68, %p69
      %p71 = scmp.ne.s32.totalorder %s60, %s63
      %p72 = scmp.eq.s32.totalorder %s15, 1
      %p73 = por %p71, %p72
      %p74 = scmp.ne.s32.totalorder %s63, %s64
      %p75 = scmp.eq.s32.totalorder %s15, 0
      %p76 = por %p74, %p75
      %p77 = scmp.ne.s32.totalorder %s63, %s64
      %p78 = scmp.eq.s32.totalorder %s16, 1
      %p79 = por %p77, %p78
      %p81 = scmp.ne.s32.totalorder %s64, %s80
      %p82 = scmp.eq.s32.totalorder %s16, 0
      %p83 = por %p81, %p82
      %s85 = sadd.s32 %s84, 1
      %p88 = scmp.eq.s32.totalorder %s10, 1
      %p89 = scmp.ne.s32.totalorder %s84, %s86
      %p90 = scmp.eq.s32.totalorder %s10, 0
      %p91 = por %p89, %p90
      %p92 = scmp.ne.s32.totalorder %s84, %s86
      %p93 = scmp.eq.s32.totalorder %s15, 1
      %p94 = por %p92, %p93
      %p95 = scmp.ne.s32.totalorder %s86, %s87
      %p96 = scmp.eq.s32.totalorder %s15, 0
      %p97 = por %p95, %p96
      %p98 = scmp.ne.s32.totalorder %s86, %s87
      %p99 = scmp.eq.s32.totalorder %s16, 1
      %p100 = por %p98, %p99
      %p102 = scmp.ne.s32.totalorder %s87, %s101
      %p103 = scmp.eq.s32.totalorder %s16, 0
      %p104 = por %p102, %p103
      %s105 = ssub.s32 %s17, %s29
      %p106 = scmp.eq.s32.totalorder %s105, 0
      %s108 = sadd.s32 %s107, 1
      %s109 = scalar_select %p106, %s107, %s108
      %p112 = pneg %p106
      %p113 = scmp.eq.s32.totalorder %s10, 1
      %p114 = por %p112, %p113
      %p115 = scmp.ne.s32.totalorder %s107, %s110
      %p116 = scmp.eq.s32.totalorder %s10, 0
      %p117 = por %p115, %p116
      %p118 = scmp.ne.s32.totalorder %s107, %s110
      %p119 = scmp.eq.s32.totalorder %s15, 1
      %p120 = por %p118, %p119
      %p121 = scmp.ne.s32.totalorder %s110, %s111
      %p122 = scmp.eq.s32.totalorder %s15, 0
      %p123 = por %p121, %p122
      %p124 = scmp.ne.s32.totalorder %s110, %s111
      %p125 = scmp.eq.s32.totalorder %s16, 1
      %p126 = por %p124, %p125
      %p128 = scmp.ne.s32.totalorder %s111, %s127
      %p129 = scmp.eq.s32.totalorder %s16, 0
      %p130 = por %p128, %p129
      %p131 = scmp.le.s32.totalorder 1, %s10
      %p132 = scmp.lt.s32.totalorder %s10, 3
      %p133 = pnand %p131, %p132
      %p134 = pneg %p133
      // Predicated region
      $region9: #{alexnet_forward.3} parent=5 // pred_check
        _
      $region10: #{alexnet_forward.3} parent=5 // pred_check_branch
        %136 = sbr.rel (%p133) target = $region12
      $region11: #{alexnet_forward.3} parent=5 // pred_region
        %s137 = ssub.s32 %s10, 1
        // Predicated region
        $region13: #{alexnet_forward.3} parent=11 // pred_check
          %p138 = pneg %p97
        $region14: #{alexnet_forward.3} parent=11 // pred_check_branch
          %140 = sbr.rel (%p138) target = $region16
        $region15: #{alexnet_forward.3} parent=11 // pred_region
          _
        $region16: #{alexnet_forward.3} parent=11 // pred_fallthru
          _
      $region12: #{alexnet_forward.3} parent=5 // pred_fallthru
        _
      %p141 = scmp.lt.s32.totalorder %s10, 2
      // Predicated region
      $region17: #{alexnet_forward.3} parent=5 // pred_check
        %p142 = pneg %p141
      $region18: #{alexnet_forward.3} parent=5 // pred_check_branch
        %144 = sbr.rel (%p142) target = $region20
      $region19: #{alexnet_forward.3} parent=5 // pred_region
        // Predicated region
        $region21: #{alexnet_forward.3} parent=19 // pred_check
          %p145 = pneg %p44
        $region22: #{alexnet_forward.3} parent=19 // pred_check_branch
          %147 = sbr.rel (%p145) target = $region24
        $region23: #{alexnet_forward.3} parent=19 // pred_region
          %s148 = smul.u32 32, %s18
          %p149 = scmp.lt.s32.totalorder %s17, 0
          %s150 = scalar_select %p149, %s17, 0
          %p151 = scmp.lt.s32.totalorder %s148, 63
          %s152 = scalar_select %p151, %s148, 63
          %s153 = smul.addr %s150, 64
          %s154 = sadd.s32 %s152, %s153
          %s155 = scalar_lea.vmem %s0, %s154
          %s156 = smul.u32 32, %s18
        $region24: #{alexnet_forward.3} parent=19 // pred_fallthru
          _
        // Predicated region
        $region25: #{alexnet_forward.3} parent=19 // pred_check
          %p157 = pneg %p70
        $region26: #{alexnet_forward.3} parent=19 // pred_check_branch
          %159 = sbr.rel (%p157) target = $region28
        $region27: #{alexnet_forward.3} parent=19 // pred_region
          %s160 = smul.u32 512, %s18
          %p161 = scmp.lt.s32.totalorder %s160, 1023
          %s162 = scalar_select %p161, %s160, 1023
          %s163 = smul.addr %s162, 4
          %s164 = scalar_lea.vmem %s1, %s163
          %s165 = smul.u32 512, %s18
        $region28: #{alexnet_forward.3} parent=19 // pred_fallthru
          _
      $region20: #{alexnet_forward.3} parent=5 // pred_fallthru
        _
      %p166 = scmp.le.s32.totalorder 1, %s10
      %p167 = scmp.lt.s32.totalorder %s10, 3
      %p168 = pnand %p166, %p167
      %p169 = pneg %p168
      // Predicated region
      $region29: #{alexnet_forward.3} parent=5 // pred_check
        _
      $region30: #{alexnet_forward.3} parent=5 // pred_check_branch
        %171 = sbr.rel (%p168) target = $region32
      $region31: #{alexnet_forward.3} parent=5 // pred_region
        %s172 = ssub.s32 %s10, 1
        %s173 = smul.u32 32, %s20
        %p174 = scmp.lt.s32.totalorder %s19, 0
        %s175 = scalar_select %p174, %s19, 0
        %p176 = scmp.lt.s32.totalorder %s173, 63
        %s177 = scalar_select %p176, %s173, 63
        %s178 = smul.addr %s175, 64
        %s179 = sadd.s32 %s177, %s178
        %s180 = scalar_lea.vmem %s0, %s179
        %p181 = pneg %p50
        %p182 = pneg %p47
        %s183 = smul.u32 512, %s20
        %p184 = scmp.lt.s32.totalorder %s183, 1023
        %s185 = scalar_select %p184, %s183, 1023
        %s186 = smul.addr %s185, 4
        %s187 = scalar_lea.vmem %s1, %s186
        %p188 = pneg %p76
        %p189 = pneg %p73
        %p190 = pneg %p97
        %p191 = pneg %p94
        %p192 = pneg %p123
        %p193 = pneg %p120
        %s194 = smul.u32 32, %s20
        %p195 = scmp.lt.s32.totalorder %s19, 0
        %s196 = scalar_select %p195, %s19, 0
        %p197 = scmp.lt.s32.totalorder %s194, 63
        %s198 = scalar_select %p197, %s194, 63
        %s199 = smul.addr %s196, 64
        %s200 = sadd.s32 %s198, %s199
        %s201 = scalar_lea.vmem %s0, %s200
        %s202 = smul.u32 32, %s20
        %s203 = smul.u32 512, %s20
        %p204 = scmp.lt.s32.totalorder %s203, 1023
        %s205 = scalar_select %p204, %s203, 1023
        %s206 = smul.addr %s205, 4
        %s207 = scalar_lea.vmem %s1, %s206
        %s208 = smul.u32 512, %s20
        %p210 = scmp.eq.s32.totalorder %s20, 0
        // Predicated region
        $region33: #{alexnet_forward.3} parent=31 // pred_check
          %p211 = pneg %p210
        $region34: #{alexnet_forward.3} parent=31 // pred_check_branch
          %213 = sbr.rel (%p211) target = $region36
        $region35: #{alexnet_forward.3} parent=31 // pred_region
          %214 = vst [vmem:[#allocation2] sm:$0x3] 0.0
        $region36: #{alexnet_forward.3} parent=31 // pred_fallthru
          _
        %v215 = vld [vmem:[#allocation2] sm:$0x3]
        %v216 = vld [vmem:[%s201] sm:$0xff]
        %v217 = vld [vmem:[%s201 + $0x8] sm:$0xff]
        %v218 = vld [vmem:[%s201 + $0x10] sm:$0xff]
        %v219 = vld [vmem:[%s201 + $0x18] sm:$0xff]
        %v220 = vld [vmem:[%s207] sm:$0xf]
        %v221 = vld [vmem:[%s207 + $0x4] sm:$0xf]
        %v222 = vld [vmem:[%s207 + $0x8] sm:$0xf]
        %v223 = vld [vmem:[%s207 + $0xc] sm:$0xf]
        %v224 = vld [vmem:[%s207 + $0x10] sm:$0xf]
        %v225 = vld [vmem:[%s207 + $0x14] sm:$0xf]
        %v226 = vld [vmem:[%s207 + $0x18] sm:$0xf]
        %v227 = vld [vmem:[%s207 + $0x1c] sm:$0xf]
        %v228 = vld [vmem:[%s207 + $0x20] sm:$0xf]
        %v229 = vld [vmem:[%s207 + $0x24] sm:$0xf]
        %v230 = vld [vmem:[%s207 + $0x28] sm:$0xf]
        %v231 = vld [vmem:[%s207 + $0x2c] sm:$0xf]
        %v232 = vld [vmem:[%s207 + $0x30] sm:$0xf]
        %v233 = vld [vmem:[%s207 + $0x34] sm:$0xf]
        %v234 = vld [vmem:[%s207 + $0x38] sm:$0xf]
        %v235 = vld [vmem:[%s207 + $0x3c] sm:$0xf]
        %v236 = vld [vmem:[%s207 + $0x40] sm:$0xf]
        %v237 = vld [vmem:[%s207 + $0x44] sm:$0xf]
        %v238 = vld [vmem:[%s207 + $0x48] sm:$0xf]
        %v239 = vld [vmem:[%s207 + $0x4c] sm:$0xf]
        %v240 = vld [vmem:[%s207 + $0x50] sm:$0xf]
        %v241 = vld [vmem:[%s207 + $0x54] sm:$0xf]
        %v242 = vld [vmem:[%s207 + $0x58] sm:$0xf]
        %v243 = vld [vmem:[%s207 + $0x5c] sm:$0xf]
        %v244 = vld [vmem:[%s207 + $0x60] sm:$0xf]
        %v245 = vld [vmem:[%s207 + $0x64] sm:$0xf]
        %v246 = vld [vmem:[%s207 + $0x68] sm:$0xf]
        %v247 = vld [vmem:[%s207 + $0x6c] sm:$0xf]
        %v248 = vld [vmem:[%s207 + $0x70] sm:$0xf]
        %v249 = vld [vmem:[%s207 + $0x74] sm:$0xf]
        %v250 = vld [vmem:[%s207 + $0x78] sm:$0xf]
        %v251 = vld [vmem:[%s207 + $0x7c] sm:$0xf]
        %v252 = vld [vmem:[%s207 + $0x80] sm:$0xf]
        %v253 = vld [vmem:[%s207 + $0x84] sm:$0xf]
        %v254 = vld [vmem:[%s207 + $0x88] sm:$0xf]
        %v255 = vld [vmem:[%s207 + $0x8c] sm:$0xf]
        %v256 = vld [vmem:[%s207 + $0x90] sm:$0xf]
        %v257 = vld [vmem:[%s207 + $0x94] sm:$0xf]
        %v258 = vld [vmem:[%s207 + $0x98] sm:$0xf]
        %v259 = vld [vmem:[%s207 + $0x9c] sm:$0xf]
        %v260 = vld [vmem:[%s207 + $0xa0] sm:$0xf]
        %v261 = vld [vmem:[%s207 + $0xa4] sm:$0xf]
        %v262 = vld [vmem:[%s207 + $0xa8] sm:$0xf]
        %v263 = vld [vmem:[%s207 + $0xac] sm:$0xf]
        %v264 = vld [vmem:[%s207 + $0xb0] sm:$0xf]
        %v265 = vld [vmem:[%s207 + $0xb4] sm:$0xf]
        %v266 = vld [vmem:[%s207 + $0xb8] sm:$0xf]
        %v267 = vld [vmem:[%s207 + $0xbc] sm:$0xf]
        %v268 = vld [vmem:[%s207 + $0xc0] sm:$0xf]
        %v269 = vld [vmem:[%s207 + $0xc4] sm:$0xf]
        %v270 = vld [vmem:[%s207 + $0xc8] sm:$0xf]
        %v271 = vld [vmem:[%s207 + $0xcc] sm:$0xf]
        %v272 = vld [vmem:[%s207 + $0xd0] sm:$0xf]
        %v273 = vld [vmem:[%s207 + $0xd4] sm:$0xf]
        %v274 = vld [vmem:[%s207 + $0xd8] sm:$0xf]
        %v275 = vld [vmem:[%s207 + $0xdc] sm:$0xf]
        %v276 = vld [vmem:[%s207 + $0xe0] sm:$0xf]
        %v277 = vld [vmem:[%s207 + $0xe4] sm:$0xf]
        %v278 = vld [vmem:[%s207 + $0xe8] sm:$0xf]
        %v279 = vld [vmem:[%s207 + $0xec] sm:$0xf]
        %v280 = vld [vmem:[%s207 + $0xf0] sm:$0xf]
        %v281 = vld [vmem:[%s207 + $0xf4] sm:$0xf]
        %v282 = vld [vmem:[%s207 + $0xf8] sm:$0xf]
        %v283 = vld [vmem:[%s207 + $0xfc] sm:$0xf]
        %v284 = vld [vmem:[%s207 + $0x100] sm:$0xf]
        %v285 = vld [vmem:[%s207 + $0x104] sm:$0xf]
        %v286 = vld [vmem:[%s207 + $0x108] sm:$0xf]
        %v287 = vld [vmem:[%s207 + $0x10c] sm:$0xf]
        %v288 = vld [vmem:[%s207 + $0x110] sm:$0xf]
        %v289 = vld [vmem:[%s207 + $0x114] sm:$0xf]
        %v290 = vld [vmem:[%s207 + $0x118] sm:$0xf]
        %v291 = vld [vmem:[%s207 + $0x11c] sm:$0xf]
        %v292 = vld [vmem:[%s207 + $0x120] sm:$0xf]
        %v293 = vld [vmem:[%s207 + $0x124] sm:$0xf]
        %v294 = vld [vmem:[%s207 + $0x128] sm:$0xf]
        %v295 = vld [vmem:[%s207 + $0x12c] sm:$0xf]
        %v296 = vld [vmem:[%s207 + $0x130] sm:$0xf]
        %v297 = vld [vmem:[%s207 + $0x134] sm:$0xf]
        %v298 = vld [vmem:[%s207 + $0x138] sm:$0xf]
        %v299 = vld [vmem:[%s207 + $0x13c] sm:$0xf]
        %v300 = vld [vmem:[%s207 + $0x140] sm:$0xf]
        %v301 = vld [vmem:[%s207 + $0x144] sm:$0xf]
        %v302 = vld [vmem:[%s207 + $0x148] sm:$0xf]
        %v303 = vld [vmem:[%s207 + $0x14c] sm:$0xf]
        %v304 = vld [vmem:[%s207 + $0x150] sm:$0xf]
        %v305 = vld [vmem:[%s207 + $0x154] sm:$0xf]
        %v306 = vld [vmem:[%s207 + $0x158] sm:$0xf]
        %v307 = vld [vmem:[%s207 + $0x15c] sm:$0xf]
        %v308 = vld [vmem:[%s207 + $0x160] sm:$0xf]
        %v309 = vld [vmem:[%s207 + $0x164] sm:$0xf]
        %v310 = vld [vmem:[%s207 + $0x168] sm:$0xf]
        %v311 = vld [vmem:[%s207 + $0x16c] sm:$0xf]
        %v312 = vld [vmem:[%s207 + $0x170] sm:$0xf]
        %v313 = vld [vmem:[%s207 + $0x174] sm:$0xf]
        %v314 = vld [vmem:[%s207 + $0x178] sm:$0xf]
        %v315 = vld [vmem:[%s207 + $0x17c] sm:$0xf]
        %v316 = vld [vmem:[%s207 + $0x180] sm:$0xf]
        %v317 = vld [vmem:[%s207 + $0x184] sm:$0xf]
        %v318 = vld [vmem:[%s207 + $0x188] sm:$0xf]
        %v319 = vld [vmem:[%s207 + $0x18c] sm:$0xf]
        %v320 = vld [vmem:[%s207 + $0x190] sm:$0xf]
        %v321 = vld [vmem:[%s207 + $0x194] sm:$0xf]
        %v322 = vld [vmem:[%s207 + $0x198] sm:$0xf]
        %v323 = vld [vmem:[%s207 + $0x19c] sm:$0xf]
        %v324 = vld [vmem:[%s207 + $0x1a0] sm:$0xf]
        %v325 = vld [vmem:[%s207 + $0x1a4] sm:$0xf]
        %v326 = vld [vmem:[%s207 + $0x1a8] sm:$0xf]
        %v327 = vld [vmem:[%s207 + $0x1ac] sm:$0xf]
        %v328 = vld [vmem:[%s207 + $0x1b0] sm:$0xf]
        %v329 = vld [vmem:[%s207 + $0x1b4] sm:$0xf]
        %v330 = vld [vmem:[%s207 + $0x1b8] sm:$0xf]
        %v331 = vld [vmem:[%s207 + $0x1bc] sm:$0xf]
        %v332 = vld [vmem:[%s207 + $0x1c0] sm:$0xf]
        %v333 = vld [vmem:[%s207 + $0x1c4] sm:$0xf]
        %v334 = vld [vmem:[%s207 + $0x1c8] sm:$0xf]
        %v335 = vld [vmem:[%s207 + $0x1cc] sm:$0xf]
        %v336 = vld [vmem:[%s207 + $0x1d0] sm:$0xf]
        %v337 = vld [vmem:[%s207 + $0x1d4] sm:$0xf]
        %v338 = vld [vmem:[%s207 + $0x1d8] sm:$0xf]
        %v339 = vld [vmem:[%s207 + $0x1dc] sm:$0xf]
        %v340 = vld [vmem:[%s207 + $0x1e0] sm:$0xf]
        %v341 = vld [vmem:[%s207 + $0x1e4] sm:$0xf]
        %v342 = vld [vmem:[%s207 + $0x1e8] sm:$0xf]
        %v343 = vld [vmem:[%s207 + $0x1ec] sm:$0xf]
        %v344 = vld [vmem:[%s207 + $0x1f0] sm:$0xf]
        %v345 = vld [vmem:[%s207 + $0x1f4] sm:$0xf]
        %v346 = vld [vmem:[%s207 + $0x1f8] sm:$0xf]
        %v347 = vld [vmem:[%s207 + $0x1fc] sm:$0xf]
        %v348 = vld [vmem:[%s207 + $0x200] sm:$0xf]
        %v349 = vld [vmem:[%s207 + $0x204] sm:$0xf]
        %v350 = vld [vmem:[%s207 + $0x208] sm:$0xf]
        %v351 = vld [vmem:[%s207 + $0x20c] sm:$0xf]
        %v352 = vld [vmem:[%s207 + $0x210] sm:$0xf]
        %v353 = vld [vmem:[%s207 + $0x214] sm:$0xf]
        %v354 = vld [vmem:[%s207 + $0x218] sm:$0xf]
        %v355 = vld [vmem:[%s207 + $0x21c] sm:$0xf]
        %v356 = vld [vmem:[%s207 + $0x220] sm:$0xf]
        %v357 = vld [vmem:[%s207 + $0x224] sm:$0xf]
        %v358 = vld [vmem:[%s207 + $0x228] sm:$0xf]
        %v359 = vld [vmem:[%s207 + $0x22c] sm:$0xf]
        %v360 = vld [vmem:[%s207 + $0x230] sm:$0xf]
        %v361 = vld [vmem:[%s207 + $0x234] sm:$0xf]
        %v362 = vld [vmem:[%s207 + $0x238] sm:$0xf]
        %v363 = vld [vmem:[%s207 + $0x23c] sm:$0xf]
        %v364 = vld [vmem:[%s207 + $0x240] sm:$0xf]
        %v365 = vld [vmem:[%s207 + $0x244] sm:$0xf]
        %v366 = vld [vmem:[%s207 + $0x248] sm:$0xf]
        %v367 = vld [vmem:[%s207 + $0x24c] sm:$0xf]
        %v368 = vld [vmem:[%s207 + $0x250] sm:$0xf]
        %v369 = vld [vmem:[%s207 + $0x254] sm:$0xf]
        %v370 = vld [vmem:[%s207 + $0x258] sm:$0xf]
        %v371 = vld [vmem:[%s207 + $0x25c] sm:$0xf]
        %v372 = vld [vmem:[%s207 + $0x260] sm:$0xf]
        %v373 = vld [vmem:[%s207 + $0x264] sm:$0xf]
        %v374 = vld [vmem:[%s207 + $0x268] sm:$0xf]
        %v375 = vld [vmem:[%s207 + $0x26c] sm:$0xf]
        %v376 = vld [vmem:[%s207 + $0x270] sm:$0xf]
        %v377 = vld [vmem:[%s207 + $0x274] sm:$0xf]
        %v378 = vld [vmem:[%s207 + $0x278] sm:$0xf]
        %v379 = vld [vmem:[%s207 + $0x27c] sm:$0xf]
        %v380 = vld [vmem:[%s207 + $0x280] sm:$0xf]
        %v381 = vld [vmem:[%s207 + $0x284] sm:$0xf]
        %v382 = vld [vmem:[%s207 + $0x288] sm:$0xf]
        %v383 = vld [vmem:[%s207 + $0x28c] sm:$0xf]
        %v384 = vld [vmem:[%s207 + $0x290] sm:$0xf]
        %v385 = vld [vmem:[%s207 + $0x294] sm:$0xf]
        %v386 = vld [vmem:[%s207 + $0x298] sm:$0xf]
        %v387 = vld [vmem:[%s207 + $0x29c] sm:$0xf]
        %v388 = vld [vmem:[%s207 + $0x2a0] sm:$0xf]
        %v389 = vld [vmem:[%s207 + $0x2a4] sm:$0xf]
        %v390 = vld [vmem:[%s207 + $0x2a8] sm:$0xf]
        %v391 = vld [vmem:[%s207 + $0x2ac] sm:$0xf]
        %v392 = vld [vmem:[%s207 + $0x2b0] sm:$0xf]
        %v393 = vld [vmem:[%s207 + $0x2b4] sm:$0xf]
        %v394 = vld [vmem:[%s207 + $0x2b8] sm:$0xf]
        %v395 = vld [vmem:[%s207 + $0x2bc] sm:$0xf]
        %v396 = vld [vmem:[%s207 + $0x2c0] sm:$0xf]
        %v397 = vld [vmem:[%s207 + $0x2c4] sm:$0xf]
        %v398 = vld [vmem:[%s207 + $0x2c8] sm:$0xf]
        %v399 = vld [vmem:[%s207 + $0x2cc] sm:$0xf]
        %v400 = vld [vmem:[%s207 + $0x2d0] sm:$0xf]
        %v401 = vld [vmem:[%s207 + $0x2d4] sm:$0xf]
        %v402 = vld [vmem:[%s207 + $0x2d8] sm:$0xf]
        %v403 = vld [vmem:[%s207 + $0x2dc] sm:$0xf]
        %v404 = vld [vmem:[%s207 + $0x2e0] sm:$0xf]
        %v405 = vld [vmem:[%s207 + $0x2e4] sm:$0xf]
        %v406 = vld [vmem:[%s207 + $0x2e8] sm:$0xf]
        %v407 = vld [vmem:[%s207 + $0x2ec] sm:$0xf]
        %v408 = vld [vmem:[%s207 + $0x2f0] sm:$0xf]
        %v409 = vld [vmem:[%s207 + $0x2f4] sm:$0xf]
        %v410 = vld [vmem:[%s207 + $0x2f8] sm:$0xf]
        %v411 = vld [vmem:[%s207 + $0x2fc] sm:$0xf]
        %v412 = vld [vmem:[%s207 + $0x300] sm:$0xf]
        %v413 = vld [vmem:[%s207 + $0x304] sm:$0xf]
        %v414 = vld [vmem:[%s207 + $0x308] sm:$0xf]
        %v415 = vld [vmem:[%s207 + $0x30c] sm:$0xf]
        %v416 = vld [vmem:[%s207 + $0x310] sm:$0xf]
        %v417 = vld [vmem:[%s207 + $0x314] sm:$0xf]
        %v418 = vld [vmem:[%s207 + $0x318] sm:$0xf]
        %v419 = vld [vmem:[%s207 + $0x31c] sm:$0xf]
        %v420 = vld [vmem:[%s207 + $0x320] sm:$0xf]
        %v421 = vld [vmem:[%s207 + $0x324] sm:$0xf]
        %v422 = vld [vmem:[%s207 + $0x328] sm:$0xf]
        %v423 = vld [vmem:[%s207 + $0x32c] sm:$0xf]
        %v424 = vld [vmem:[%s207 + $0x330] sm:$0xf]
        %v425 = vld [vmem:[%s207 + $0x334] sm:$0xf]
        %v426 = vld [vmem:[%s207 + $0x338] sm:$0xf]
        %v427 = vld [vmem:[%s207 + $0x33c] sm:$0xf]
        %v428 = vld [vmem:[%s207 + $0x340] sm:$0xf]
        %v429 = vld [vmem:[%s207 + $0x344] sm:$0xf]
        %v430 = vld [vmem:[%s207 + $0x348] sm:$0xf]
        %v431 = vld [vmem:[%s207 + $0x34c] sm:$0xf]
        %v432 = vld [vmem:[%s207 + $0x350] sm:$0xf]
        %v433 = vld [vmem:[%s207 + $0x354] sm:$0xf]
        %v434 = vld [vmem:[%s207 + $0x358] sm:$0xf]
        %v435 = vld [vmem:[%s207 + $0x35c] sm:$0xf]
        %v436 = vld [vmem:[%s207 + $0x360] sm:$0xf]
        %v437 = vld [vmem:[%s207 + $0x364] sm:$0xf]
        %v438 = vld [vmem:[%s207 + $0x368] sm:$0xf]
        %v439 = vld [vmem:[%s207 + $0x36c] sm:$0xf]
        %v440 = vld [vmem:[%s207 + $0x370] sm:$0xf]
        %v441 = vld [vmem:[%s207 + $0x374] sm:$0xf]
        %v442 = vld [vmem:[%s207 + $0x378] sm:$0xf]
        %v443 = vld [vmem:[%s207 + $0x37c] sm:$0xf]
        %v444 = vld [vmem:[%s207 + $0x380] sm:$0xf]
        %v445 = vld [vmem:[%s207 + $0x384] sm:$0xf]
        %v446 = vld [vmem:[%s207 + $0x388] sm:$0xf]
        %v447 = vld [vmem:[%s207 + $0x38c] sm:$0xf]
        %v448 = vld [vmem:[%s207 + $0x390] sm:$0xf]
        %v449 = vld [vmem:[%s207 + $0x394] sm:$0xf]
        %v450 = vld [vmem:[%s207 + $0x398] sm:$0xf]
        %v451 = vld [vmem:[%s207 + $0x39c] sm:$0xf]
        %v452 = vld [vmem:[%s207 + $0x3a0] sm:$0xf]
        %v453 = vld [vmem:[%s207 + $0x3a4] sm:$0xf]
        %v454 = vld [vmem:[%s207 + $0x3a8] sm:$0xf]
        %v455 = vld [vmem:[%s207 + $0x3ac] sm:$0xf]
        %v456 = vld [vmem:[%s207 + $0x3b0] sm:$0xf]
        %v457 = vld [vmem:[%s207 + $0x3b4] sm:$0xf]
        %v458 = vld [vmem:[%s207 + $0x3b8] sm:$0xf]
        %v459 = vld [vmem:[%s207 + $0x3bc] sm:$0xf]
        %v460 = vld [vmem:[%s207 + $0x3c0] sm:$0xf]
        %v461 = vld [vmem:[%s207 + $0x3c4] sm:$0xf]
        %v462 = vld [vmem:[%s207 + $0x3c8] sm:$0xf]
        %v463 = vld [vmem:[%s207 + $0x3cc] sm:$0xf]
        %v464 = vld [vmem:[%s207 + $0x3d0] sm:$0xf]
        %v465 = vld [vmem:[%s207 + $0x3d4] sm:$0xf]
        %v466 = vld [vmem:[%s207 + $0x3d8] sm:$0xf]
        %v467 = vld [vmem:[%s207 + $0x3dc] sm:$0xf]
        %v468 = vld [vmem:[%s207 + $0x3e0] sm:$0xf]
        %v469 = vld [vmem:[%s207 + $0x3e4] sm:$0xf]
        %v470 = vld [vmem:[%s207 + $0x3e8] sm:$0xf]
        %v471 = vld [vmem:[%s207 + $0x3ec] sm:$0xf]
        %v472 = vld [vmem:[%s207 + $0x3f0] sm:$0xf]
        %v473 = vld [vmem:[%s207 + $0x3f4] sm:$0xf]
        %v474 = vld [vmem:[%s207 + $0x3f8] sm:$0xf]
        %v475 = vld [vmem:[%s207 + $0x3fc] sm:$0xf]
        %v476 = vld [vmem:[%s207 + $0x400] sm:$0xf]
        %v477 = vld [vmem:[%s207 + $0x404] sm:$0xf]
        %v478 = vld [vmem:[%s207 + $0x408] sm:$0xf]
        %v479 = vld [vmem:[%s207 + $0x40c] sm:$0xf]
        %v480 = vld [vmem:[%s207 + $0x410] sm:$0xf]
        %v481 = vld [vmem:[%s207 + $0x414] sm:$0xf]
        %v482 = vld [vmem:[%s207 + $0x418] sm:$0xf]
        %v483 = vld [vmem:[%s207 + $0x41c] sm:$0xf]
        %v484 = vld [vmem:[%s207 + $0x420] sm:$0xf]
        %v485 = vld [vmem:[%s207 + $0x424] sm:$0xf]
        %v486 = vld [vmem:[%s207 + $0x428] sm:$0xf]
        %v487 = vld [vmem:[%s207 + $0x42c] sm:$0xf]
        %v488 = vld [vmem:[%s207 + $0x430] sm:$0xf]
        %v489 = vld [vmem:[%s207 + $0x434] sm:$0xf]
        %v490 = vld [vmem:[%s207 + $0x438] sm:$0xf]
        %v491 = vld [vmem:[%s207 + $0x43c] sm:$0xf]
        %v492 = vld [vmem:[%s207 + $0x440] sm:$0xf]
        %v493 = vld [vmem:[%s207 + $0x444] sm:$0xf]
        %v494 = vld [vmem:[%s207 + $0x448] sm:$0xf]
        %v495 = vld [vmem:[%s207 + $0x44c] sm:$0xf]
        %v496 = vld [vmem:[%s207 + $0x450] sm:$0xf]
        %v497 = vld [vmem:[%s207 + $0x454] sm:$0xf]
        %v498 = vld [vmem:[%s207 + $0x458] sm:$0xf]
        %v499 = vld [vmem:[%s207 + $0x45c] sm:$0xf]
        %v500 = vld [vmem:[%s207 + $0x460] sm:$0xf]
        %v501 = vld [vmem:[%s207 + $0x464] sm:$0xf]
        %v502 = vld [vmem:[%s207 + $0x468] sm:$0xf]
        %v503 = vld [vmem:[%s207 + $0x46c] sm:$0xf]
        %v504 = vld [vmem:[%s207 + $0x470] sm:$0xf]
        %v505 = vld [vmem:[%s207 + $0x474] sm:$0xf]
        %v506 = vld [vmem:[%s207 + $0x478] sm:$0xf]
        %v507 = vld [vmem:[%s207 + $0x47c] sm:$0xf]
        %v508 = vld [vmem:[%s207 + $0x480] sm:$0xf]
        %v509 = vld [vmem:[%s207 + $0x484] sm:$0xf]
        %v510 = vld [vmem:[%s207 + $0x488] sm:$0xf]
        %v511 = vld [vmem:[%s207 + $0x48c] sm:$0xf]
        %v512 = vld [vmem:[%s207 + $0x490] sm:$0xf]
        %v513 = vld [vmem:[%s207 + $0x494] sm:$0xf]
        %v514 = vld [vmem:[%s207 + $0x498] sm:$0xf]
        %v515 = vld [vmem:[%s207 + $0x49c] sm:$0xf]
        %v516 = vld [vmem:[%s207 + $0x4a0] sm:$0xf]
        %v517 = vld [vmem:[%s207 + $0x4a4] sm:$0xf]
        %v518 = vld [vmem:[%s207 + $0x4a8] sm:$0xf]
        %v519 = vld [vmem:[%s207 + $0x4ac] sm:$0xf]
        %v520 = vld [vmem:[%s207 + $0x4b0] sm:$0xf]
        %v521 = vld [vmem:[%s207 + $0x4b4] sm:$0xf]
        %v522 = vld [vmem:[%s207 + $0x4b8] sm:$0xf]
        %v523 = vld [vmem:[%s207 + $0x4bc] sm:$0xf]
        %v524 = vld [vmem:[%s207 + $0x4c0] sm:$0xf]
        %v525 = vld [vmem:[%s207 + $0x4c4] sm:$0xf]
        %v526 = vld [vmem:[%s207 + $0x4c8] sm:$0xf]
        %v527 = vld [vmem:[%s207 + $0x4cc] sm:$0xf]
        %v528 = vld [vmem:[%s207 + $0x4d0] sm:$0xf]
        %v529 = vld [vmem:[%s207 + $0x4d4] sm:$0xf]
        %v530 = vld [vmem:[%s207 + $0x4d8] sm:$0xf]
        %v531 = vld [vmem:[%s207 + $0x4dc] sm:$0xf]
        %v532 = vld [vmem:[%s207 + $0x4e0] sm:$0xf]
        %v533 = vld [vmem:[%s207 + $0x4e4] sm:$0xf]
        %v534 = vld [vmem:[%s207 + $0x4e8] sm:$0xf]
        %v535 = vld [vmem:[%s207 + $0x4ec] sm:$0xf]
        %v536 = vld [vmem:[%s207 + $0x4f0] sm:$0xf]
        %v537 = vld [vmem:[%s207 + $0x4f4] sm:$0xf]
        %v538 = vld [vmem:[%s207 + $0x4f8] sm:$0xf]
        %v539 = vld [vmem:[%s207 + $0x4fc] sm:$0xf]
        %v540 = vld [vmem:[%s207 + $0x500] sm:$0xf]
        %v541 = vld [vmem:[%s207 + $0x504] sm:$0xf]
        %v542 = vld [vmem:[%s207 + $0x508] sm:$0xf]
        %v543 = vld [vmem:[%s207 + $0x50c] sm:$0xf]
        %v544 = vld [vmem:[%s207 + $0x510] sm:$0xf]
        %v545 = vld [vmem:[%s207 + $0x514] sm:$0xf]
        %v546 = vld [vmem:[%s207 + $0x518] sm:$0xf]
        %v547 = vld [vmem:[%s207 + $0x51c] sm:$0xf]
        %v548 = vld [vmem:[%s207 + $0x520] sm:$0xf]
        %v549 = vld [vmem:[%s207 + $0x524] sm:$0xf]
        %v550 = vld [vmem:[%s207 + $0x528] sm:$0xf]
        %v551 = vld [vmem:[%s207 + $0x52c] sm:$0xf]
        %v552 = vld [vmem:[%s207 + $0x530] sm:$0xf]
        %v553 = vld [vmem:[%s207 + $0x534] sm:$0xf]
        %v554 = vld [vmem:[%s207 + $0x538] sm:$0xf]
        %v555 = vld [vmem:[%s207 + $0x53c] sm:$0xf]
        %v556 = vld [vmem:[%s207 + $0x540] sm:$0xf]
        %v557 = vld [vmem:[%s207 + $0x544] sm:$0xf]
        %v558 = vld [vmem:[%s207 + $0x548] sm:$0xf]
        %v559 = vld [vmem:[%s207 + $0x54c] sm:$0xf]
        %v560 = vld [vmem:[%s207 + $0x550] sm:$0xf]
        %v561 = vld [vmem:[%s207 + $0x554] sm:$0xf]
        %v562 = vld [vmem:[%s207 + $0x558] sm:$0xf]
        %v563 = vld [vmem:[%s207 + $0x55c] sm:$0xf]
        %v564 = vld [vmem:[%s207 + $0x560] sm:$0xf]
        %v565 = vld [vmem:[%s207 + $0x564] sm:$0xf]
        %v566 = vld [vmem:[%s207 + $0x568] sm:$0xf]
        %v567 = vld [vmem:[%s207 + $0x56c] sm:$0xf]
        %v568 = vld [vmem:[%s207 + $0x570] sm:$0xf]
        %v569 = vld [vmem:[%s207 + $0x574] sm:$0xf]
        %v570 = vld [vmem:[%s207 + $0x578] sm:$0xf]
        %v571 = vld [vmem:[%s207 + $0x57c] sm:$0xf]
        %v572 = vld [vmem:[%s207 + $0x580] sm:$0xf]
        %v573 = vld [vmem:[%s207 + $0x584] sm:$0xf]
        %v574 = vld [vmem:[%s207 + $0x588] sm:$0xf]
        %v575 = vld [vmem:[%s207 + $0x58c] sm:$0xf]
        %v576 = vld [vmem:[%s207 + $0x590] sm:$0xf]
        %v577 = vld [vmem:[%s207 + $0x594] sm:$0xf]
        %v578 = vld [vmem:[%s207 + $0x598] sm:$0xf]
        %v579 = vld [vmem:[%s207 + $0x59c] sm:$0xf]
        %v580 = vld [vmem:[%s207 + $0x5a0] sm:$0xf]
        %v581 = vld [vmem:[%s207 + $0x5a4] sm:$0xf]
        %v582 = vld [vmem:[%s207 + $0x5a8] sm:$0xf]
        %v583 = vld [vmem:[%s207 + $0x5ac] sm:$0xf]
        %v584 = vld [vmem:[%s207 + $0x5b0] sm:$0xf]
        %v585 = vld [vmem:[%s207 + $0x5b4] sm:$0xf]
        %v586 = vld [vmem:[%s207 + $0x5b8] sm:$0xf]
        %v587 = vld [vmem:[%s207 + $0x5bc] sm:$0xf]
        %v588 = vld [vmem:[%s207 + $0x5c0] sm:$0xf]
        %v589 = vld [vmem:[%s207 + $0x5c4] sm:$0xf]
        %v590 = vld [vmem:[%s207 + $0x5c8] sm:$0xf]
        %v591 = vld [vmem:[%s207 + $0x5cc] sm:$0xf]
        %v592 = vld [vmem:[%s207 + $0x5d0] sm:$0xf]
        %v593 = vld [vmem:[%s207 + $0x5d4] sm:$0xf]
        %v594 = vld [vmem:[%s207 + $0x5d8] sm:$0xf]
        %v595 = vld [vmem:[%s207 + $0x5dc] sm:$0xf]
        %v596 = vld [vmem:[%s207 + $0x5e0] sm:$0xf]
        %v597 = vld [vmem:[%s207 + $0x5e4] sm:$0xf]
        %v598 = vld [vmem:[%s207 + $0x5e8] sm:$0xf]
        %v599 = vld [vmem:[%s207 + $0x5ec] sm:$0xf]
        %v600 = vld [vmem:[%s207 + $0x5f0] sm:$0xf]
        %v601 = vld [vmem:[%s207 + $0x5f4] sm:$0xf]
        %v602 = vld [vmem:[%s207 + $0x5f8] sm:$0xf]
        %v603 = vld [vmem:[%s207 + $0x5fc] sm:$0xf]
        %v604 = vld [vmem:[%s207 + $0x600] sm:$0xf]
        %v605 = vld [vmem:[%s207 + $0x604] sm:$0xf]
        %v606 = vld [vmem:[%s207 + $0x608] sm:$0xf]
        %v607 = vld [vmem:[%s207 + $0x60c] sm:$0xf]
        %v608 = vld [vmem:[%s207 + $0x610] sm:$0xf]
        %v609 = vld [vmem:[%s207 + $0x614] sm:$0xf]
        %v610 = vld [vmem:[%s207 + $0x618] sm:$0xf]
        %v611 = vld [vmem:[%s207 + $0x61c] sm:$0xf]
        %v612 = vld [vmem:[%s207 + $0x620] sm:$0xf]
        %v613 = vld [vmem:[%s207 + $0x624] sm:$0xf]
        %v614 = vld [vmem:[%s207 + $0x628] sm:$0xf]
        %v615 = vld [vmem:[%s207 + $0x62c] sm:$0xf]
        %v616 = vld [vmem:[%s207 + $0x630] sm:$0xf]
        %v617 = vld [vmem:[%s207 + $0x634] sm:$0xf]
        %v618 = vld [vmem:[%s207 + $0x638] sm:$0xf]
        %v619 = vld [vmem:[%s207 + $0x63c] sm:$0xf]
        %v620 = vld [vmem:[%s207 + $0x640] sm:$0xf]
        %v621 = vld [vmem:[%s207 + $0x644] sm:$0xf]
        %v622 = vld [vmem:[%s207 + $0x648] sm:$0xf]
        %v623 = vld [vmem:[%s207 + $0x64c] sm:$0xf]
        %v624 = vld [vmem:[%s207 + $0x650] sm:$0xf]
        %v625 = vld [vmem:[%s207 + $0x654] sm:$0xf]
        %v626 = vld [vmem:[%s207 + $0x658] sm:$0xf]
        %v627 = vld [vmem:[%s207 + $0x65c] sm:$0xf]
        %v628 = vld [vmem:[%s207 + $0x660] sm:$0xf]
        %v629 = vld [vmem:[%s207 + $0x664] sm:$0xf]
        %v630 = vld [vmem:[%s207 + $0x668] sm:$0xf]
        %v631 = vld [vmem:[%s207 + $0x66c] sm:$0xf]
        %v632 = vld [vmem:[%s207 + $0x670] sm:$0xf]
        %v633 = vld [vmem:[%s207 + $0x674] sm:$0xf]
        %v634 = vld [vmem:[%s207 + $0x678] sm:$0xf]
        %v635 = vld [vmem:[%s207 + $0x67c] sm:$0xf]
        %v636 = vld [vmem:[%s207 + $0x680] sm:$0xf]
        %v637 = vld [vmem:[%s207 + $0x684] sm:$0xf]
        %v638 = vld [vmem:[%s207 + $0x688] sm:$0xf]
        %v639 = vld [vmem:[%s207 + $0x68c] sm:$0xf]
        %v640 = vld [vmem:[%s207 + $0x690] sm:$0xf]
        %v641 = vld [vmem:[%s207 + $0x694] sm:$0xf]
        %v642 = vld [vmem:[%s207 + $0x698] sm:$0xf]
        %v643 = vld [vmem:[%s207 + $0x69c] sm:$0xf]
        %v644 = vld [vmem:[%s207 + $0x6a0] sm:$0xf]
        %v645 = vld [vmem:[%s207 + $0x6a4] sm:$0xf]
        %v646 = vld [vmem:[%s207 + $0x6a8] sm:$0xf]
        %v647 = vld [vmem:[%s207 + $0x6ac] sm:$0xf]
        %v648 = vld [vmem:[%s207 + $0x6b0] sm:$0xf]
        %v649 = vld [vmem:[%s207 + $0x6b4] sm:$0xf]
        %v650 = vld [vmem:[%s207 + $0x6b8] sm:$0xf]
        %v651 = vld [vmem:[%s207 + $0x6bc] sm:$0xf]
        %v652 = vld [vmem:[%s207 + $0x6c0] sm:$0xf]
        %v653 = vld [vmem:[%s207 + $0x6c4] sm:$0xf]
        %v654 = vld [vmem:[%s207 + $0x6c8] sm:$0xf]
        %v655 = vld [vmem:[%s207 + $0x6cc] sm:$0xf]
        %v656 = vld [vmem:[%s207 + $0x6d0] sm:$0xf]
        %v657 = vld [vmem:[%s207 + $0x6d4] sm:$0xf]
        %v658 = vld [vmem:[%s207 + $0x6d8] sm:$0xf]
        %v659 = vld [vmem:[%s207 + $0x6dc] sm:$0xf]
        %v660 = vld [vmem:[%s207 + $0x6e0] sm:$0xf]
        %v661 = vld [vmem:[%s207 + $0x6e4] sm:$0xf]
        %v662 = vld [vmem:[%s207 + $0x6e8] sm:$0xf]
        %v663 = vld [vmem:[%s207 + $0x6ec] sm:$0xf]
        %v664 = vld [vmem:[%s207 + $0x6f0] sm:$0xf]
        %v665 = vld [vmem:[%s207 + $0x6f4] sm:$0xf]
        %v666 = vld [vmem:[%s207 + $0x6f8] sm:$0xf]
        %v667 = vld [vmem:[%s207 + $0x6fc] sm:$0xf]
        %v668 = vld [vmem:[%s207 + $0x700] sm:$0xf]
        %v669 = vld [vmem:[%s207 + $0x704] sm:$0xf]
        %v670 = vld [vmem:[%s207 + $0x708] sm:$0xf]
        %v671 = vld [vmem:[%s207 + $0x70c] sm:$0xf]
        %v672 = vld [vmem:[%s207 + $0x710] sm:$0xf]
        %v673 = vld [vmem:[%s207 + $0x714] sm:$0xf]
        %v674 = vld [vmem:[%s207 + $0x718] sm:$0xf]
        %v675 = vld [vmem:[%s207 + $0x71c] sm:$0xf]
        %v676 = vld [vmem:[%s207 + $0x720] sm:$0xf]
        %v677 = vld [vmem:[%s207 + $0x724] sm:$0xf]
        %v678 = vld [vmem:[%s207 + $0x728] sm:$0xf]
        %v679 = vld [vmem:[%s207 + $0x72c] sm:$0xf]
        %v680 = vld [vmem:[%s207 + $0x730] sm:$0xf]
        %v681 = vld [vmem:[%s207 + $0x734] sm:$0xf]
        %v682 = vld [vmem:[%s207 + $0x738] sm:$0xf]
        %v683 = vld [vmem:[%s207 + $0x73c] sm:$0xf]
        %v684 = vld [vmem:[%s207 + $0x740] sm:$0xf]
        %v685 = vld [vmem:[%s207 + $0x744] sm:$0xf]
        %v686 = vld [vmem:[%s207 + $0x748] sm:$0xf]
        %v687 = vld [vmem:[%s207 + $0x74c] sm:$0xf]
        %v688 = vld [vmem:[%s207 + $0x750] sm:$0xf]
        %v689 = vld [vmem:[%s207 + $0x754] sm:$0xf]
        %v690 = vld [vmem:[%s207 + $0x758] sm:$0xf]
        %v691 = vld [vmem:[%s207 + $0x75c] sm:$0xf]
        %v692 = vld [vmem:[%s207 + $0x760] sm:$0xf]
        %v693 = vld [vmem:[%s207 + $0x764] sm:$0xf]
        %v694 = vld [vmem:[%s207 + $0x768] sm:$0xf]
        %v695 = vld [vmem:[%s207 + $0x76c] sm:$0xf]
        %v696 = vld [vmem:[%s207 + $0x770] sm:$0xf]
        %v697 = vld [vmem:[%s207 + $0x774] sm:$0xf]
        %v698 = vld [vmem:[%s207 + $0x778] sm:$0xf]
        %v699 = vld [vmem:[%s207 + $0x77c] sm:$0xf]
        %v700 = vld [vmem:[%s207 + $0x780] sm:$0xf]
        %v701 = vld [vmem:[%s207 + $0x784] sm:$0xf]
        %v702 = vld [vmem:[%s207 + $0x788] sm:$0xf]
        %v703 = vld [vmem:[%s207 + $0x78c] sm:$0xf]
        %v704 = vld [vmem:[%s207 + $0x790] sm:$0xf]
        %v705 = vld [vmem:[%s207 + $0x794] sm:$0xf]
        %v706 = vld [vmem:[%s207 + $0x798] sm:$0xf]
        %v707 = vld [vmem:[%s207 + $0x79c] sm:$0xf]
        %v708 = vld [vmem:[%s207 + $0x7a0] sm:$0xf]
        %v709 = vld [vmem:[%s207 + $0x7a4] sm:$0xf]
        %v710 = vld [vmem:[%s207 + $0x7a8] sm:$0xf]
        %v711 = vld [vmem:[%s207 + $0x7ac] sm:$0xf]
        %v712 = vld [vmem:[%s207 + $0x7b0] sm:$0xf]
        %v713 = vld [vmem:[%s207 + $0x7b4] sm:$0xf]
        %v714 = vld [vmem:[%s207 + $0x7b8] sm:$0xf]
        %v715 = vld [vmem:[%s207 + $0x7bc] sm:$0xf]
        %v716 = vld [vmem:[%s207 + $0x7c0] sm:$0xf]
        %v717 = vld [vmem:[%s207 + $0x7c4] sm:$0xf]
        %v718 = vld [vmem:[%s207 + $0x7c8] sm:$0xf]
        %v719 = vld [vmem:[%s207 + $0x7cc] sm:$0xf]
        %v720 = vld [vmem:[%s207 + $0x7d0] sm:$0xf]
        %v721 = vld [vmem:[%s207 + $0x7d4] sm:$0xf]
        %v722 = vld [vmem:[%s207 + $0x7d8] sm:$0xf]
        %v723 = vld [vmem:[%s207 + $0x7dc] sm:$0xf]
        %v724 = vld [vmem:[%s207 + $0x7e0] sm:$0xf]
        %v725 = vld [vmem:[%s207 + $0x7e4] sm:$0xf]
        %v726 = vld [vmem:[%s207 + $0x7e8] sm:$0xf]
        %v727 = vld [vmem:[%s207 + $0x7ec] sm:$0xf]
        %v728 = vld [vmem:[%s207 + $0x7f0] sm:$0xf]
        %v729 = vld [vmem:[%s207 + $0x7f4] sm:$0xf]
        %v730 = vld [vmem:[%s207 + $0x7f8] sm:$0xf]
        %v731 = vld [vmem:[%s207 + $0x7fc] sm:$0xf]
        %v736 = vcombine.high %v216, %v216
        %v738 = vunpack.c.l.s4 1966171168
        %v739 = vunpack.c.0.s8 %v738
        %v740 = vlaneseq
        %v741 = vshrl.u32 %v740, 7
        %v742 = vsub.s32 %v739, %v741
        %v743 = vrot.slane %v216, %v742
        %v745 = vunpack.c.l.s4 1966171168
        %v746 = vunpack.c.0.s8 %v745
        %v747 = vlaneseq
        %v748 = vshrl.u32 %v747, 7
        %v749 = vsub.s32 %v746, %v748
        %v750 = vrot.slane %v736, %v749
        %v751 = vcombine.high %v743, %v743
        %v752 = vcombine.high %v750, %v750
        %v754 = vunpack.c.l.s4 1966171168
        %v755 = vunpack.c.0.s8 %v754
        %v756 = vlaneseq
        %v757 = vshrl.u32 %v756, 7
        %v758 = vsub.s32 %v755, %v757
        %v759 = vrot.slane %v743, %v758
        %v761 = vunpack.c.l.s4 1966171168
        %v762 = vunpack.c.0.s8 %v761
        %v763 = vlaneseq
        %v764 = vshrl.u32 %v763, 7
        %v765 = vsub.s32 %v762, %v764
        %v766 = vrot.slane %v750, %v765
        %v768 = vunpack.c.l.s4 1966171168
        %v769 = vunpack.c.0.s8 %v768
        %v770 = vlaneseq
        %v771 = vshrl.u32 %v770, 7
        %v772 = vsub.s32 %v769, %v771
        %v773 = vrot.slane %v751, %v772
        %v775 = vunpack.c.l.s4 1966171168
        %v776 = vunpack.c.0.s8 %v775
        %v777 = vlaneseq
        %v778 = vshrl.u32 %v777, 7
        %v779 = vsub.s32 %v776, %v778
        %v780 = vrot.slane %v752, %v779
        %v781 = vcombine.high %v759, %v759
        %v782 = vcombine.high %v766, %v766
        %v783 = vcombine.high %v773, %v773
        %v784 = vcombine.high %v780, %v780
        %v785 = vcombine.high %v217, %v217
        %v787 = vunpack.c.l.s4 1966171168
        %v788 = vunpack.c.0.s8 %v787
        %v789 = vlaneseq
        %v790 = vshrl.u32 %v789, 7
        %v791 = vsub.s32 %v788, %v790
        %v792 = vrot.slane %v217, %v791
        %v794 = vunpack.c.l.s4 1966171168
        %v795 = vunpack.c.0.s8 %v794
        %v796 = vlaneseq
        %v797 = vshrl.u32 %v796, 7
        %v798 = vsub.s32 %v795, %v797
        %v799 = vrot.slane %v785, %v798
        %v800 = vcombine.high %v792, %v792
        %v801 = vcombine.high %v799, %v799
        %v803 = vunpack.c.l.s4 1966171168
        %v804 = vunpack.c.0.s8 %v803
        %v805 = vlaneseq
        %v806 = vshrl.u32 %v805, 7
        %v807 = vsub.s32 %v804, %v806
        %v808 = vrot.slane %v792, %v807
        %v810 = vunpack.c.l.s4 1966171168
        %v811 = vunpack.c.0.s8 %v810
        %v812 = vlaneseq
        %v813 = vshrl.u32 %v812, 7
        %v814 = vsub.s32 %v811, %v813
        %v815 = vrot.slane %v799, %v814
        %v817 = vunpack.c.l.s4 1966171168
        %v818 = vunpack.c.0.s8 %v817
        %v819 = vlaneseq
        %v820 = vshrl.u32 %v819, 7
        %v821 = vsub.s32 %v818, %v820
        %v822 = vrot.slane %v800, %v821
        %v824 = vunpack.c.l.s4 1966171168
        %v825 = vunpack.c.0.s8 %v824
        %v826 = vlaneseq
        %v827 = vshrl.u32 %v826, 7
        %v828 = vsub.s32 %v825, %v827
        %v829 = vrot.slane %v801, %v828
        %v830 = vcombine.high %v808, %v808
        %v831 = vcombine.high %v815, %v815
        %v832 = vcombine.high %v822, %v822
        %v833 = vcombine.high %v829, %v829
        %v834 = vcombine.high %v218, %v218
        %v836 = vunpack.c.l.s4 1966171168
        %v837 = vunpack.c.0.s8 %v836
        %v838 = vlaneseq
        %v839 = vshrl.u32 %v838, 7
        %v840 = vsub.s32 %v837, %v839
        %v841 = vrot.slane %v218, %v840
        %v843 = vunpack.c.l.s4 1966171168
        %v844 = vunpack.c.0.s8 %v843
        %v845 = vlaneseq
        %v846 = vshrl.u32 %v845, 7
        %v847 = vsub.s32 %v844, %v846
        %v848 = vrot.slane %v834, %v847
        %v849 = vcombine.high %v841, %v841
        %v850 = vcombine.high %v848, %v848
        %v852 = vunpack.c.l.s4 1966171168
        %v853 = vunpack.c.0.s8 %v852
        %v854 = vlaneseq
        %v855 = vshrl.u32 %v854, 7
        %v856 = vsub.s32 %v853, %v855
        %v857 = vrot.slane %v841, %v856
        %v859 = vunpack.c.l.s4 1966171168
        %v860 = vunpack.c.0.s8 %v859
        %v861 = vlaneseq
        %v862 = vshrl.u32 %v861, 7
        %v863 = vsub.s32 %v860, %v862
        %v864 = vrot.slane %v848, %v863
        %v866 = vunpack.c.l.s4 1966171168
        %v867 = vunpack.c.0.s8 %v866
        %v868 = vlaneseq
        %v869 = vshrl.u32 %v868, 7
        %v870 = vsub.s32 %v867, %v869
        %v871 = vrot.slane %v849, %v870
        %v873 = vunpack.c.l.s4 1966171168
        %v874 = vunpack.c.0.s8 %v873
        %v875 = vlaneseq
        %v876 = vshrl.u32 %v875, 7
        %v877 = vsub.s32 %v874, %v876
        %v878 = vrot.slane %v850, %v877
        %v879 = vcombine.high %v857, %v857
        %v880 = vcombine.high %v864, %v864
        %v881 = vcombine.high %v871, %v871
        %v882 = vcombine.high %v878, %v878
        %v883 = vcombine.high %v219, %v219
        %v885 = vunpack.c.l.s4 1966171168
        %v886 = vunpack.c.0.s8 %v885
        %v887 = vlaneseq
        %v888 = vshrl.u32 %v887, 7
        %v889 = vsub.s32 %v886, %v888
        %v890 = vrot.slane %v219, %v889
        %v892 = vunpack.c.l.s4 1966171168
        %v893 = vunpack.c.0.s8 %v892
        %v894 = vlaneseq
        %v895 = vshrl.u32 %v894, 7
        %v896 = vsub.s32 %v893, %v895
        %v897 = vrot.slane %v883, %v896
        %v898 = vcombine.high %v890, %v890
        %v899 = vcombine.high %v897, %v897
        %v901 = vunpack.c.l.s4 1966171168
        %v902 = vunpack.c.0.s8 %v901
        %v903 = vlaneseq
        %v904 = vshrl.u32 %v903, 7
        %v905 = vsub.s32 %v902, %v904
        %v906 = vrot.slane %v890, %v905
        %v908 = vunpack.c.l.s4 1966171168
        %v909 = vunpack.c.0.s8 %v908
        %v910 = vlaneseq
        %v911 = vshrl.u32 %v910, 7
        %v912 = vsub.s32 %v909, %v911
        %v913 = vrot.slane %v897, %v912
        %v915 = vunpack.c.l.s4 1966171168
        %v916 = vunpack.c.0.s8 %v915
        %v917 = vlaneseq
        %v918 = vshrl.u32 %v917, 7
        %v919 = vsub.s32 %v916, %v918
        %v920 = vrot.slane %v898, %v919
        %v922 = vunpack.c.l.s4 1966171168
        %v923 = vunpack.c.0.s8 %v922
        %v924 = vlaneseq
        %v925 = vshrl.u32 %v924, 7
        %v926 = vsub.s32 %v923, %v925
        %v927 = vrot.slane %v899, %v926
        %v928 = vcombine.high %v906, %v906
        %v929 = vcombine.high %v913, %v913
        %v930 = vcombine.high %v920, %v920
        %v931 = vcombine.high %v927, %v927
        %v1476 = vunpack.c.l.b16 %v220
        %v1477 = vunpack.c.l.b16 %v221
        %v1478 = vunpack.c.l.b16 %v222
        %v1479 = vunpack.c.l.b16 %v223
        %v1480 = vunpack.c.l.b16 %v224
        %v1481 = vunpack.c.l.b16 %v225
        %v1482 = vunpack.c.l.b16 %v226
        %v1483 = vunpack.c.l.b16 %v227
        %v1484 = vunpack.c.l.b16 %v228
        %v1485 = vunpack.c.l.b16 %v229
        %v1486 = vunpack.c.l.b16 %v230
        %v1487 = vunpack.c.l.b16 %v231
        %v1488 = vunpack.c.l.b16 %v232
        %v1489 = vunpack.c.l.b16 %v233
        %v1490 = vunpack.c.l.b16 %v234
        %v1491 = vunpack.c.l.b16 %v235
        %v1492 = vunpack.c.l.b16 %v236
        %v1493 = vunpack.c.l.b16 %v237
        %v1494 = vunpack.c.l.b16 %v238
        %v1495 = vunpack.c.l.b16 %v239
        %v1496 = vunpack.c.l.b16 %v240
        %v1497 = vunpack.c.l.b16 %v241
        %v1498 = vunpack.c.l.b16 %v242
        %v1499 = vunpack.c.l.b16 %v243
        %v1500 = vunpack.c.l.b16 %v244
        %v1501 = vunpack.c.l.b16 %v245
        %v1502 = vunpack.c.l.b16 %v246
        %v1503 = vunpack.c.l.b16 %v247
        %v1504 = vunpack.c.l.b16 %v248
        %v1505 = vunpack.c.l.b16 %v249
        %v1506 = vunpack.c.l.b16 %v250
        %v1507 = vunpack.c.l.b16 %v251
        %v1508 = vunpack.c.l.b16 %v252
        %v1509 = vunpack.c.l.b16 %v253
        %v1510 = vunpack.c.l.b16 %v254
        %v1511 = vunpack.c.l.b16 %v255
        %v1512 = vunpack.c.l.b16 %v256
        %v1513 = vunpack.c.l.b16 %v257
        %v1514 = vunpack.c.l.b16 %v258
        %v1515 = vunpack.c.l.b16 %v259
        %v1516 = vunpack.c.l.b16 %v260
        %v1517 = vunpack.c.l.b16 %v261
        %v1518 = vunpack.c.l.b16 %v262
        %v1519 = vunpack.c.l.b16 %v263
        %v1520 = vunpack.c.l.b16 %v264
        %v1521 = vunpack.c.l.b16 %v265
        %v1522 = vunpack.c.l.b16 %v266
        %v1523 = vunpack.c.l.b16 %v267
        %v1524 = vunpack.c.l.b16 %v268
        %v1525 = vunpack.c.l.b16 %v269
        %v1526 = vunpack.c.l.b16 %v270
        %v1527 = vunpack.c.l.b16 %v271
        %v1528 = vunpack.c.l.b16 %v272
        %v1529 = vunpack.c.l.b16 %v273
        %v1530 = vunpack.c.l.b16 %v274
        %v1531 = vunpack.c.l.b16 %v275
        %v1532 = vunpack.c.l.b16 %v276
        %v1533 = vunpack.c.l.b16 %v277
        %v1534 = vunpack.c.l.b16 %v278
        %v1535 = vunpack.c.l.b16 %v279
        %v1536 = vunpack.c.l.b16 %v280
        %v1537 = vunpack.c.l.b16 %v281
        %v1538 = vunpack.c.l.b16 %v282
        %v1539 = vunpack.c.l.b16 %v283
        %v1540 = vunpack.c.l.b16 %v284
        %v1541 = vunpack.c.l.b16 %v285
        %v1542 = vunpack.c.l.b16 %v286
        %v1543 = vunpack.c.l.b16 %v287
        %v1544 = vunpack.c.l.b16 %v288
        %v1545 = vunpack.c.l.b16 %v289
        %v1546 = vunpack.c.l.b16 %v290
        %v1547 = vunpack.c.l.b16 %v291
        %v1548 = vunpack.c.l.b16 %v292
        %v1549 = vunpack.c.l.b16 %v293
        %v1550 = vunpack.c.l.b16 %v294
        %v1551 = vunpack.c.l.b16 %v295
        %v1552 = vunpack.c.l.b16 %v296
        %v1553 = vunpack.c.l.b16 %v297
        %v1554 = vunpack.c.l.b16 %v298
        %v1555 = vunpack.c.l.b16 %v299
        %v1556 = vunpack.c.l.b16 %v300
        %v1557 = vunpack.c.l.b16 %v301
        %v1558 = vunpack.c.l.b16 %v302
        %v1559 = vunpack.c.l.b16 %v303
        %v1560 = vunpack.c.l.b16 %v304
        %v1561 = vunpack.c.l.b16 %v305
        %v1562 = vunpack.c.l.b16 %v306
        %v1563 = vunpack.c.l.b16 %v307
        %v1564 = vunpack.c.l.b16 %v308
        %v1565 = vunpack.c.l.b16 %v309
        %v1566 = vunpack.c.l.b16 %v310
        %v1567 = vunpack.c.l.b16 %v311
        %v1568 = vunpack.c.l.b16 %v312
        %v1569 = vunpack.c.l.b16 %v313
        %v1570 = vunpack.c.l.b16 %v314
        %v1571 = vunpack.c.l.b16 %v315
        %v1572 = vunpack.c.l.b16 %v316
        %v1573 = vunpack.c.l.b16 %v317
        %v1574 = vunpack.c.l.b16 %v318
        %v1575 = vunpack.c.l.b16 %v319
        %v1576 = vunpack.c.l.b16 %v320
        %v1577 = vunpack.c.l.b16 %v321
        %v1578 = vunpack.c.l.b16 %v322
        %v1579 = vunpack.c.l.b16 %v323
        %v1580 = vunpack.c.l.b16 %v324
        %v1581 = vunpack.c.l.b16 %v325
        %v1582 = vunpack.c.l.b16 %v326
        %v1583 = vunpack.c.l.b16 %v327
        %v1584 = vunpack.c.l.b16 %v328
        %v1585 = vunpack.c.l.b16 %v329
        %v1586 = vunpack.c.l.b16 %v330
        %v1587 = vunpack.c.l.b16 %v331
        %v1588 = vunpack.c.l.b16 %v332
        %v1589 = vunpack.c.l.b16 %v333
        %v1590 = vunpack.c.l.b16 %v334
        %v1591 = vunpack.c.l.b16 %v335
        %v1592 = vunpack.c.l.b16 %v336
        %v1593 = vunpack.c.l.b16 %v337
        %v1594 = vunpack.c.l.b16 %v338
        %v1595 = vunpack.c.l.b16 %v339
        %v1596 = vunpack.c.l.b16 %v340
        %v1597 = vunpack.c.l.b16 %v341
        %v1598 = vunpack.c.l.b16 %v342
        %v1599 = vunpack.c.l.b16 %v343
        %v1600 = vunpack.c.l.b16 %v344
        %v1601 = vunpack.c.l.b16 %v345
        %v1602 = vunpack.c.l.b16 %v346
        %v1603 = vunpack.c.l.b16 %v347
        %v1604 = vunpack.c.l.b16 %v348
        %v1605 = vunpack.c.l.b16 %v349
        %v1606 = vunpack.c.l.b16 %v350
        %v1607 = vunpack.c.l.b16 %v351
        %v1608 = vunpack.c.l.b16 %v352
        %v1609 = vunpack.c.l.b16 %v353
        %v1610 = vunpack.c.l.b16 %v354
        %v1611 = vunpack.c.l.b16 %v355
        %v1612 = vunpack.c.l.b16 %v356
        %v1613 = vunpack.c.l.b16 %v357
        %v1614 = vunpack.c.l.b16 %v358
        %v1615 = vunpack.c.l.b16 %v359
        %v1616 = vunpack.c.l.b16 %v360
        %v1617 = vunpack.c.l.b16 %v361
        %v1618 = vunpack.c.l.b16 %v362
        %v1619 = vunpack.c.l.b16 %v363
        %v1620 = vunpack.c.l.b16 %v364
        %v1621 = vunpack.c.l.b16 %v365
        %v1622 = vunpack.c.l.b16 %v366
        %v1623 = vunpack.c.l.b16 %v367
        %v1624 = vunpack.c.l.b16 %v368
        %v1625 = vunpack.c.l.b16 %v369
        %v1626 = vunpack.c.l.b16 %v370
        %v1627 = vunpack.c.l.b16 %v371
        %v1628 = vunpack.c.l.b16 %v372
        %v1629 = vunpack.c.l.b16 %v373
        %v1630 = vunpack.c.l.b16 %v374
        %v1631 = vunpack.c.l.b16 %v375
        %v1632 = vunpack.c.l.b16 %v376
        %v1633 = vunpack.c.l.b16 %v377
        %v1634 = vunpack.c.l.b16 %v378
        %v1635 = vunpack.c.l.b16 %v379
        %v1636 = vunpack.c.l.b16 %v380
        %v1637 = vunpack.c.l.b16 %v381
        %v1638 = vunpack.c.l.b16 %v382
        %v1639 = vunpack.c.l.b16 %v383
        %v1640 = vunpack.c.l.b16 %v384
        %v1641 = vunpack.c.l.b16 %v385
        %v1642 = vunpack.c.l.b16 %v386
        %v1643 = vunpack.c.l.b16 %v387
        %v1644 = vunpack.c.l.b16 %v388
        %v1645 = vunpack.c.l.b16 %v389
        %v1646 = vunpack.c.l.b16 %v390
        %v1647 = vunpack.c.l.b16 %v391
        %v1648 = vunpack.c.l.b16 %v392
        %v1649 = vunpack.c.l.b16 %v393
        %v1650 = vunpack.c.l.b16 %v394
        %v1651 = vunpack.c.l.b16 %v395
        %v1652 = vunpack.c.l.b16 %v396
        %v1653 = vunpack.c.l.b16 %v397
        %v1654 = vunpack.c.l.b16 %v398
        %v1655 = vunpack.c.l.b16 %v399
        %v1656 = vunpack.c.l.b16 %v400
        %v1657 = vunpack.c.l.b16 %v401
        %v1658 = vunpack.c.l.b16 %v402
        %v1659 = vunpack.c.l.b16 %v403
        %v1660 = vunpack.c.l.b16 %v404
        %v1661 = vunpack.c.l.b16 %v405
        %v1662 = vunpack.c.l.b16 %v406
        %v1663 = vunpack.c.l.b16 %v407
        %v1664 = vunpack.c.l.b16 %v408
        %v1665 = vunpack.c.l.b16 %v409
        %v1666 = vunpack.c.l.b16 %v410
        %v1667 = vunpack.c.l.b16 %v411
        %v1668 = vunpack.c.l.b16 %v412
        %v1669 = vunpack.c.l.b16 %v413
        %v1670 = vunpack.c.l.b16 %v414
        %v1671 = vunpack.c.l.b16 %v415
        %v1672 = vunpack.c.l.b16 %v416
        %v1673 = vunpack.c.l.b16 %v417
        %v1674 = vunpack.c.l.b16 %v418
        %v1675 = vunpack.c.l.b16 %v419
        %v1676 = vunpack.c.l.b16 %v420
        %v1677 = vunpack.c.l.b16 %v421
        %v1678 = vunpack.c.l.b16 %v422
        %v1679 = vunpack.c.l.b16 %v423
        %v1680 = vunpack.c.l.b16 %v424
        %v1681 = vunpack.c.l.b16 %v425
        %v1682 = vunpack.c.l.b16 %v426
        %v1683 = vunpack.c.l.b16 %v427
        %v1684 = vunpack.c.l.b16 %v428
        %v1685 = vunpack.c.l.b16 %v429
        %v1686 = vunpack.c.l.b16 %v430
        %v1687 = vunpack.c.l.b16 %v431
        %v1688 = vunpack.c.l.b16 %v432
        %v1689 = vunpack.c.l.b16 %v433
        %v1690 = vunpack.c.l.b16 %v434
        %v1691 = vunpack.c.l.b16 %v435
        %v1692 = vunpack.c.l.b16 %v436
        %v1693 = vunpack.c.l.b16 %v437
        %v1694 = vunpack.c.l.b16 %v438
        %v1695 = vunpack.c.l.b16 %v439
        %v1696 = vunpack.c.l.b16 %v440
        %v1697 = vunpack.c.l.b16 %v441
        %v1698 = vunpack.c.l.b16 %v442
        %v1699 = vunpack.c.l.b16 %v443
        %v1700 = vunpack.c.l.b16 %v444
        %v1701 = vunpack.c.l.b16 %v445
        %v1702 = vunpack.c.l.b16 %v446
        %v1703 = vunpack.c.l.b16 %v447
        %v1704 = vunpack.c.l.b16 %v448
        %v1705 = vunpack.c.l.b16 %v449
        %v1706 = vunpack.c.l.b16 %v450
        %v1707 = vunpack.c.l.b16 %v451
        %v1708 = vunpack.c.l.b16 %v452
        %v1709 = vunpack.c.l.b16 %v453
        %v1710 = vunpack.c.l.b16 %v454
        %v1711 = vunpack.c.l.b16 %v455
        %v1712 = vunpack.c.l.b16 %v456
        %v1713 = vunpack.c.l.b16 %v457
        %v1714 = vunpack.c.l.b16 %v458
        %v1715 = vunpack.c.l.b16 %v459
        %v1716 = vunpack.c.l.b16 %v460
        %v1717 = vunpack.c.l.b16 %v461
        %v1718 = vunpack.c.l.b16 %v462
        %v1719 = vunpack.c.l.b16 %v463
        %v1720 = vunpack.c.l.b16 %v464
        %v1721 = vunpack.c.l.b16 %v465
        %v1722 = vunpack.c.l.b16 %v466
        %v1723 = vunpack.c.l.b16 %v467
        %v1724 = vunpack.c.l.b16 %v468
        %v1725 = vunpack.c.l.b16 %v469
        %v1726 = vunpack.c.l.b16 %v470
        %v1727 = vunpack.c.l.b16 %v471
        %v1728 = vunpack.c.l.b16 %v472
        %v1729 = vunpack.c.l.b16 %v473
        %v1730 = vunpack.c.l.b16 %v474
        %v1731 = vunpack.c.l.b16 %v475
        %v1732 = vunpack.c.l.b16 %v476
        %v1733 = vunpack.c.l.b16 %v477
        %v1734 = vunpack.c.l.b16 %v478
        %v1735 = vunpack.c.l.b16 %v479
        %v1736 = vunpack.c.l.b16 %v480
        %v1737 = vunpack.c.l.b16 %v481
        %v1738 = vunpack.c.l.b16 %v482
        %v1739 = vunpack.c.l.b16 %v483
        %v1740 = vunpack.c.l.b16 %v484
        %v1741 = vunpack.c.l.b16 %v485
        %v1742 = vunpack.c.l.b16 %v486
        %v1743 = vunpack.c.l.b16 %v487
        %v1744 = vunpack.c.l.b16 %v488
        %v1745 = vunpack.c.l.b16 %v489
        %v1746 = vunpack.c.l.b16 %v490
        %v1747 = vunpack.c.l.b16 %v491
        %v1748 = vunpack.c.l.b16 %v492
        %v1749 = vunpack.c.l.b16 %v493
        %v1750 = vunpack.c.l.b16 %v494
        %v1751 = vunpack.c.l.b16 %v495
        %v1752 = vunpack.c.l.b16 %v496
        %v1753 = vunpack.c.l.b16 %v497
        %v1754 = vunpack.c.l.b16 %v498
        %v1755 = vunpack.c.l.b16 %v499
        %v1756 = vunpack.c.l.b16 %v500
        %v1757 = vunpack.c.l.b16 %v501
        %v1758 = vunpack.c.l.b16 %v502
        %v1759 = vunpack.c.l.b16 %v503
        %v1760 = vunpack.c.l.b16 %v504
        %v1761 = vunpack.c.l.b16 %v505
        %v1762 = vunpack.c.l.b16 %v506
        %v1763 = vunpack.c.l.b16 %v507
        %v1764 = vunpack.c.l.b16 %v508
        %v1765 = vunpack.c.l.b16 %v509
        %v1766 = vunpack.c.l.b16 %v510
        %v1767 = vunpack.c.l.b16 %v511
        %v1768 = vunpack.c.l.b16 %v512
        %v1769 = vunpack.c.l.b16 %v513
        %v1770 = vunpack.c.l.b16 %v514
        %v1771 = vunpack.c.l.b16 %v515
        %v1772 = vunpack.c.l.b16 %v516
        %v1773 = vunpack.c.l.b16 %v517
        %v1774 = vunpack.c.l.b16 %v518
        %v1775 = vunpack.c.l.b16 %v519
        %v1776 = vunpack.c.l.b16 %v520
        %v1777 = vunpack.c.l.b16 %v521
        %v1778 = vunpack.c.l.b16 %v522
        %v1779 = vunpack.c.l.b16 %v523
        %v1780 = vunpack.c.l.b16 %v524
        %v1781 = vunpack.c.l.b16 %v525
        %v1782 = vunpack.c.l.b16 %v526
        %v1783 = vunpack.c.l.b16 %v527
        %v1784 = vunpack.c.l.b16 %v528
        %v1785 = vunpack.c.l.b16 %v529
        %v1786 = vunpack.c.l.b16 %v530
        %v1787 = vunpack.c.l.b16 %v531
        %v1788 = vunpack.c.l.b16 %v532
        %v1789 = vunpack.c.l.b16 %v533
        %v1790 = vunpack.c.l.b16 %v534
        %v1791 = vunpack.c.l.b16 %v535
        %v1792 = vunpack.c.l.b16 %v536
        %v1793 = vunpack.c.l.b16 %v537
        %v1794 = vunpack.c.l.b16 %v538
        %v1795 = vunpack.c.l.b16 %v539
        %v1796 = vunpack.c.l.b16 %v540
        %v1797 = vunpack.c.l.b16 %v541
        %v1798 = vunpack.c.l.b16 %v542
        %v1799 = vunpack.c.l.b16 %v543
        %v1800 = vunpack.c.l.b16 %v544
        %v1801 = vunpack.c.l.b16 %v545
        %v1802 = vunpack.c.l.b16 %v546
        %v1803 = vunpack.c.l.b16 %v547
        %v1804 = vunpack.c.l.b16 %v548
        %v1805 = vunpack.c.l.b16 %v549
        %v1806 = vunpack.c.l.b16 %v550
        %v1807 = vunpack.c.l.b16 %v551
        %v1808 = vunpack.c.l.b16 %v552
        %v1809 = vunpack.c.l.b16 %v553
        %v1810 = vunpack.c.l.b16 %v554
        %v1811 = vunpack.c.l.b16 %v555
        %v1812 = vunpack.c.l.b16 %v556
        %v1813 = vunpack.c.l.b16 %v557
        %v1814 = vunpack.c.l.b16 %v558
        %v1815 = vunpack.c.l.b16 %v559
        %v1816 = vunpack.c.l.b16 %v560
        %v1817 = vunpack.c.l.b16 %v561
        %v1818 = vunpack.c.l.b16 %v562
        %v1819 = vunpack.c.l.b16 %v563
        %v1820 = vunpack.c.l.b16 %v564
        %v1821 = vunpack.c.l.b16 %v565
        %v1822 = vunpack.c.l.b16 %v566
        %v1823 = vunpack.c.l.b16 %v567
        %v1824 = vunpack.c.l.b16 %v568
        %v1825 = vunpack.c.l.b16 %v569
        %v1826 = vunpack.c.l.b16 %v570
        %v1827 = vunpack.c.l.b16 %v571
        %v1828 = vunpack.c.l.b16 %v572
        %v1829 = vunpack.c.l.b16 %v573
        %v1830 = vunpack.c.l.b16 %v574
        %v1831 = vunpack.c.l.b16 %v575
        %v1832 = vunpack.c.l.b16 %v576
        %v1833 = vunpack.c.l.b16 %v577
        %v1834 = vunpack.c.l.b16 %v578
        %v1835 = vunpack.c.l.b16 %v579
        %v1836 = vunpack.c.l.b16 %v580
        %v1837 = vunpack.c.l.b16 %v581
        %v1838 = vunpack.c.l.b16 %v582
        %v1839 = vunpack.c.l.b16 %v583
        %v1840 = vunpack.c.l.b16 %v584
        %v1841 = vunpack.c.l.b16 %v585
        %v1842 = vunpack.c.l.b16 %v586
        %v1843 = vunpack.c.l.b16 %v587
        %v1844 = vunpack.c.l.b16 %v588
        %v1845 = vunpack.c.l.b16 %v589
        %v1846 = vunpack.c.l.b16 %v590
        %v1847 = vunpack.c.l.b16 %v591
        %v1848 = vunpack.c.l.b16 %v592
        %v1849 = vunpack.c.l.b16 %v593
        %v1850 = vunpack.c.l.b16 %v594
        %v1851 = vunpack.c.l.b16 %v595
        %v1852 = vunpack.c.l.b16 %v596
        %v1853 = vunpack.c.l.b16 %v597
        %v1854 = vunpack.c.l.b16 %v598
        %v1855 = vunpack.c.l.b16 %v599
        %v1856 = vunpack.c.l.b16 %v600
        %v1857 = vunpack.c.l.b16 %v601
        %v1858 = vunpack.c.l.b16 %v602
        %v1859 = vunpack.c.l.b16 %v603
        %v1860 = vunpack.c.l.b16 %v604
        %v1861 = vunpack.c.l.b16 %v605
        %v1862 = vunpack.c.l.b16 %v606
        %v1863 = vunpack.c.l.b16 %v607
        %v1864 = vunpack.c.l.b16 %v608
        %v1865 = vunpack.c.l.b16 %v609
        %v1866 = vunpack.c.l.b16 %v610
        %v1867 = vunpack.c.l.b16 %v611
        %v1868 = vunpack.c.l.b16 %v612
        %v1869 = vunpack.c.l.b16 %v613
        %v1870 = vunpack.c.l.b16 %v614
        %v1871 = vunpack.c.l.b16 %v615
        %v1872 = vunpack.c.l.b16 %v616
        %v1873 = vunpack.c.l.b16 %v617
        %v1874 = vunpack.c.l.b16 %v618
        %v1875 = vunpack.c.l.b16 %v619
        %v1876 = vunpack.c.l.b16 %v620
        %v1877 = vunpack.c.l.b16 %v621
        %v1878 = vunpack.c.l.b16 %v622
        %v1879 = vunpack.c.l.b16 %v623
        %v1880 = vunpack.c.l.b16 %v624
        %v1881 = vunpack.c.l.b16 %v625
        %v1882 = vunpack.c.l.b16 %v626
        %v1883 = vunpack.c.l.b16 %v627
        %v1884 = vunpack.c.l.b16 %v628
        %v1885 = vunpack.c.l.b16 %v629
        %v1886 = vunpack.c.l.b16 %v630
        %v1887 = vunpack.c.l.b16 %v631
        %v1888 = vunpack.c.l.b16 %v632
        %v1889 = vunpack.c.l.b16 %v633
        %v1890 = vunpack.c.l.b16 %v634
        %v1891 = vunpack.c.l.b16 %v635
        %v1892 = vunpack.c.l.b16 %v636
        %v1893 = vunpack.c.l.b16 %v637
        %v1894 = vunpack.c.l.b16 %v638
        %v1895 = vunpack.c.l.b16 %v639
        %v1896 = vunpack.c.l.b16 %v640
        %v1897 = vunpack.c.l.b16 %v641
        %v1898 = vunpack.c.l.b16 %v642
        %v1899 = vunpack.c.l.b16 %v643
        %v1900 = vunpack.c.l.b16 %v644
        %v1901 = vunpack.c.l.b16 %v645
        %v1902 = vunpack.c.l.b16 %v646
        %v1903 = vunpack.c.l.b16 %v647
        %v1904 = vunpack.c.l.b16 %v648
        %v1905 = vunpack.c.l.b16 %v649
        %v1906 = vunpack.c.l.b16 %v650
        %v1907 = vunpack.c.l.b16 %v651
        %v1908 = vunpack.c.l.b16 %v652
        %v1909 = vunpack.c.l.b16 %v653
        %v1910 = vunpack.c.l.b16 %v654
        %v1911 = vunpack.c.l.b16 %v655
        %v1912 = vunpack.c.l.b16 %v656
        %v1913 = vunpack.c.l.b16 %v657
        %v1914 = vunpack.c.l.b16 %v658
        %v1915 = vunpack.c.l.b16 %v659
        %v1916 = vunpack.c.l.b16 %v660
        %v1917 = vunpack.c.l.b16 %v661
        %v1918 = vunpack.c.l.b16 %v662
        %v1919 = vunpack.c.l.b16 %v663
        %v1920 = vunpack.c.l.b16 %v664
        %v1921 = vunpack.c.l.b16 %v665
        %v1922 = vunpack.c.l.b16 %v666
        %v1923 = vunpack.c.l.b16 %v667
        %v1924 = vunpack.c.l.b16 %v668
        %v1925 = vunpack.c.l.b16 %v669
        %v1926 = vunpack.c.l.b16 %v670
        %v1927 = vunpack.c.l.b16 %v671
        %v1928 = vunpack.c.l.b16 %v672
        %v1929 = vunpack.c.l.b16 %v673
        %v1930 = vunpack.c.l.b16 %v674
        %v1931 = vunpack.c.l.b16 %v675
        %v1932 = vunpack.c.l.b16 %v676
        %v1933 = vunpack.c.l.b16 %v677
        %v1934 = vunpack.c.l.b16 %v678
        %v1935 = vunpack.c.l.b16 %v679
        %v1936 = vunpack.c.l.b16 %v680
        %v1937 = vunpack.c.l.b16 %v681
        %v1938 = vunpack.c.l.b16 %v682
        %v1939 = vunpack.c.l.b16 %v683
        %v1940 = vunpack.c.l.b16 %v684
        %v1941 = vunpack.c.l.b16 %v685
        %v1942 = vunpack.c.l.b16 %v686
        %v1943 = vunpack.c.l.b16 %v687
        %v1944 = vunpack.c.l.b16 %v688
        %v1945 = vunpack.c.l.b16 %v689
        %v1946 = vunpack.c.l.b16 %v690
        %v1947 = vunpack.c.l.b16 %v691
        %v1948 = vunpack.c.l.b16 %v692
        %v1949 = vunpack.c.l.b16 %v693
        %v1950 = vunpack.c.l.b16 %v694
        %v1951 = vunpack.c.l.b16 %v695
        %v1952 = vunpack.c.l.b16 %v696
        %v1953 = vunpack.c.l.b16 %v697
        %v1954 = vunpack.c.l.b16 %v698
        %v1955 = vunpack.c.l.b16 %v699
        %v1956 = vunpack.c.l.b16 %v700
        %v1957 = vunpack.c.l.b16 %v701
        %v1958 = vunpack.c.l.b16 %v702
        %v1959 = vunpack.c.l.b16 %v703
        %v1960 = vunpack.c.l.b16 %v704
        %v1961 = vunpack.c.l.b16 %v705
        %v1962 = vunpack.c.l.b16 %v706
        %v1963 = vunpack.c.l.b16 %v707
        %v1964 = vunpack.c.l.b16 %v708
        %v1965 = vunpack.c.l.b16 %v709
        %v1966 = vunpack.c.l.b16 %v710
        %v1967 = vunpack.c.l.b16 %v711
        %v1968 = vunpack.c.l.b16 %v712
        %v1969 = vunpack.c.l.b16 %v713
        %v1970 = vunpack.c.l.b16 %v714
        %v1971 = vunpack.c.l.b16 %v715
        %v1972 = vunpack.c.l.b16 %v716
        %v1973 = vunpack.c.l.b16 %v717
        %v1974 = vunpack.c.l.b16 %v718
        %v1975 = vunpack.c.l.b16 %v719
        %v1976 = vunpack.c.l.b16 %v720
        %v1977 = vunpack.c.l.b16 %v721
        %v1978 = vunpack.c.l.b16 %v722
        %v1979 = vunpack.c.l.b16 %v723
        %v1980 = vunpack.c.l.b16 %v724
        %v1981 = vunpack.c.l.b16 %v725
        %v1982 = vunpack.c.l.b16 %v726
        %v1983 = vunpack.c.l.b16 %v727
        %v1984 = vunpack.c.l.b16 %v728
        %v1985 = vunpack.c.l.b16 %v729
        %v1986 = vunpack.c.l.b16 %v730
        %v1987 = vunpack.c.l.b16 %v731
        %v1988 = vpack.c.b16 %v1477, %v1476
        %v1989 = vpack.c.b16 %v1479, %v1478
        %v1990 = vpack.c.b16 %v1481, %v1480
        %v1991 = vpack.c.b16 %v1483, %v1482
        %v1992 = vpack.c.b16 %v1485, %v1484
        %v1993 = vpack.c.b16 %v1487, %v1486
        %v1994 = vpack.c.b16 %v1489, %v1488
        %v1995 = vpack.c.b16 %v1491, %v1490
        %v1996 = vpack.c.b16 %v1493, %v1492
        %v1997 = vpack.c.b16 %v1495, %v1494
        %v1998 = vpack.c.b16 %v1497, %v1496
        %v1999 = vpack.c.b16 %v1499, %v1498
        %v2000 = vpack.c.b16 %v1501, %v1500
        %v2001 = vpack.c.b16 %v1503, %v1502
        %v2002 = vpack.c.b16 %v1505, %v1504
        %v2003 = vpack.c.b16 %v1507, %v1506
        %v2004 = vpack.c.b16 %v1509, %v1508
        %v2005 = vpack.c.b16 %v1511, %v1510
        %v2006 = vpack.c.b16 %v1513, %v1512
        %v2007 = vpack.c.b16 %v1515, %v1514
        %v2008 = vpack.c.b16 %v1517, %v1516
        %v2009 = vpack.c.b16 %v1519, %v1518
        %v2010 = vpack.c.b16 %v1521, %v1520
        %v2011 = vpack.c.b16 %v1523, %v1522
        %v2012 = vpack.c.b16 %v1525, %v1524
        %v2013 = vpack.c.b16 %v1527, %v1526
        %v2014 = vpack.c.b16 %v1529, %v1528
        %v2015 = vpack.c.b16 %v1531, %v1530
        %v2016 = vpack.c.b16 %v1533, %v1532
        %v2017 = vpack.c.b16 %v1535, %v1534
        %v2018 = vpack.c.b16 %v1537, %v1536
        %v2019 = vpack.c.b16 %v1539, %v1538
        %v2020 = vpack.c.b16 %v1541, %v1540
        %v2021 = vpack.c.b16 %v1543, %v1542
        %v2022 = vpack.c.b16 %v1545, %v1544
        %v2023 = vpack.c.b16 %v1547, %v1546
        %v2024 = vpack.c.b16 %v1549, %v1548
        %v2025 = vpack.c.b16 %v1551, %v1550
        %v2026 = vpack.c.b16 %v1553, %v1552
        %v2027 = vpack.c.b16 %v1555, %v1554
        %v2028 = vpack.c.b16 %v1557, %v1556
        %v2029 = vpack.c.b16 %v1559, %v1558
        %v2030 = vpack.c.b16 %v1561, %v1560
        %v2031 = vpack.c.b16 %v1563, %v1562
        %v2032 = vpack.c.b16 %v1565, %v1564
        %v2033 = vpack.c.b16 %v1567, %v1566
        %v2034 = vpack.c.b16 %v1569, %v1568
        %v2035 = vpack.c.b16 %v1571, %v1570
        %v2036 = vpack.c.b16 %v1573, %v1572
        %v2037 = vpack.c.b16 %v1575, %v1574
        %v2038 = vpack.c.b16 %v1577, %v1576
        %v2039 = vpack.c.b16 %v1579, %v1578
        %v2040 = vpack.c.b16 %v1581, %v1580
        %v2041 = vpack.c.b16 %v1583, %v1582
        %v2042 = vpack.c.b16 %v1585, %v1584
        %v2043 = vpack.c.b16 %v1587, %v1586
        %v2044 = vpack.c.b16 %v1589, %v1588
        %v2045 = vpack.c.b16 %v1591, %v1590
        %v2046 = vpack.c.b16 %v1593, %v1592
        %v2047 = vpack.c.b16 %v1595, %v1594
        %v2048 = vpack.c.b16 %v1597, %v1596
        %v2049 = vpack.c.b16 %v1599, %v1598
        %v2050 = vpack.c.b16 %v1601, %v1600
        %v2051 = vpack.c.b16 %v1603, %v1602
        %v2052 = vpack.c.b16 %v1605, %v1604
        %v2053 = vpack.c.b16 %v1607, %v1606
        %v2054 = vpack.c.b16 %v1609, %v1608
        %v2055 = vpack.c.b16 %v1611, %v1610
        %v2056 = vpack.c.b16 %v1613, %v1612
        %v2057 = vpack.c.b16 %v1615, %v1614
        %v2058 = vpack.c.b16 %v1617, %v1616
        %v2059 = vpack.c.b16 %v1619, %v1618
        %v2060 = vpack.c.b16 %v1621, %v1620
        %v2061 = vpack.c.b16 %v1623, %v1622
        %v2062 = vpack.c.b16 %v1625, %v1624
        %v2063 = vpack.c.b16 %v1627, %v1626
        %v2064 = vpack.c.b16 %v1629, %v1628
        %v2065 = vpack.c.b16 %v1631, %v1630
        %v2066 = vpack.c.b16 %v1633, %v1632
        %v2067 = vpack.c.b16 %v1635, %v1634
        %v2068 = vpack.c.b16 %v1637, %v1636
        %v2069 = vpack.c.b16 %v1639, %v1638
        %v2070 = vpack.c.b16 %v1641, %v1640
        %v2071 = vpack.c.b16 %v1643, %v1642
        %v2072 = vpack.c.b16 %v1645, %v1644
        %v2073 = vpack.c.b16 %v1647, %v1646
        %v2074 = vpack.c.b16 %v1649, %v1648
        %v2075 = vpack.c.b16 %v1651, %v1650
        %v2076 = vpack.c.b16 %v1653, %v1652
        %v2077 = vpack.c.b16 %v1655, %v1654
        %v2078 = vpack.c.b16 %v1657, %v1656
        %v2079 = vpack.c.b16 %v1659, %v1658
        %v2080 = vpack.c.b16 %v1661, %v1660
        %v2081 = vpack.c.b16 %v1663, %v1662
        %v2082 = vpack.c.b16 %v1665, %v1664
        %v2083 = vpack.c.b16 %v1667, %v1666
        %v2084 = vpack.c.b16 %v1669, %v1668
        %v2085 = vpack.c.b16 %v1671, %v1670
        %v2086 = vpack.c.b16 %v1673, %v1672
        %v2087 = vpack.c.b16 %v1675, %v1674
        %v2088 = vpack.c.b16 %v1677, %v1676
        %v2089 = vpack.c.b16 %v1679, %v1678
        %v2090 = vpack.c.b16 %v1681, %v1680
        %v2091 = vpack.c.b16 %v1683, %v1682
        %v2092 = vpack.c.b16 %v1685, %v1684
        %v2093 = vpack.c.b16 %v1687, %v1686
        %v2094 = vpack.c.b16 %v1689, %v1688
        %v2095 = vpack.c.b16 %v1691, %v1690
        %v2096 = vpack.c.b16 %v1693, %v1692
        %v2097 = vpack.c.b16 %v1695, %v1694
        %v2098 = vpack.c.b16 %v1697, %v1696
        %v2099 = vpack.c.b16 %v1699, %v1698
        %v2100 = vpack.c.b16 %v1701, %v1700
        %v2101 = vpack.c.b16 %v1703, %v1702
        %v2102 = vpack.c.b16 %v1705, %v1704
        %v2103 = vpack.c.b16 %v1707, %v1706
        %v2104 = vpack.c.b16 %v1709, %v1708
        %v2105 = vpack.c.b16 %v1711, %v1710
        %v2106 = vpack.c.b16 %v1713, %v1712
        %v2107 = vpack.c.b16 %v1715, %v1714
        %v2108 = vpack.c.b16 %v1717, %v1716
        %v2109 = vpack.c.b16 %v1719, %v1718
        %v2110 = vpack.c.b16 %v1721, %v1720
        %v2111 = vpack.c.b16 %v1723, %v1722
        %v2112 = vpack.c.b16 %v1725, %v1724
        %v2113 = vpack.c.b16 %v1727, %v1726
        %v2114 = vpack.c.b16 %v1729, %v1728
        %v2115 = vpack.c.b16 %v1731, %v1730
        %v2116 = vpack.c.b16 %v1733, %v1732
        %v2117 = vpack.c.b16 %v1735, %v1734
        %v2118 = vpack.c.b16 %v1737, %v1736
        %v2119 = vpack.c.b16 %v1739, %v1738
        %v2120 = vpack.c.b16 %v1741, %v1740
        %v2121 = vpack.c.b16 %v1743, %v1742
        %v2122 = vpack.c.b16 %v1745, %v1744
        %v2123 = vpack.c.b16 %v1747, %v1746
        %v2124 = vpack.c.b16 %v1749, %v1748
        %v2125 = vpack.c.b16 %v1751, %v1750
        %v2126 = vpack.c.b16 %v1753, %v1752
        %v2127 = vpack.c.b16 %v1755, %v1754
        %v2128 = vpack.c.b16 %v1757, %v1756
        %v2129 = vpack.c.b16 %v1759, %v1758
        %v2130 = vpack.c.b16 %v1761, %v1760
        %v2131 = vpack.c.b16 %v1763, %v1762
        %v2132 = vpack.c.b16 %v1765, %v1764
        %v2133 = vpack.c.b16 %v1767, %v1766
        %v2134 = vpack.c.b16 %v1769, %v1768
        %v2135 = vpack.c.b16 %v1771, %v1770
        %v2136 = vpack.c.b16 %v1773, %v1772
        %v2137 = vpack.c.b16 %v1775, %v1774
        %v2138 = vpack.c.b16 %v1777, %v1776
        %v2139 = vpack.c.b16 %v1779, %v1778
        %v2140 = vpack.c.b16 %v1781, %v1780
        %v2141 = vpack.c.b16 %v1783, %v1782
        %v2142 = vpack.c.b16 %v1785, %v1784
        %v2143 = vpack.c.b16 %v1787, %v1786
        %v2144 = vpack.c.b16 %v1789, %v1788
        %v2145 = vpack.c.b16 %v1791, %v1790
        %v2146 = vpack.c.b16 %v1793, %v1792
        %v2147 = vpack.c.b16 %v1795, %v1794
        %v2148 = vpack.c.b16 %v1797, %v1796
        %v2149 = vpack.c.b16 %v1799, %v1798
        %v2150 = vpack.c.b16 %v1801, %v1800
        %v2151 = vpack.c.b16 %v1803, %v1802
        %v2152 = vpack.c.b16 %v1805, %v1804
        %v2153 = vpack.c.b16 %v1807, %v1806
        %v2154 = vpack.c.b16 %v1809, %v1808
        %v2155 = vpack.c.b16 %v1811, %v1810
        %v2156 = vpack.c.b16 %v1813, %v1812
        %v2157 = vpack.c.b16 %v1815, %v1814
        %v2158 = vpack.c.b16 %v1817, %v1816
        %v2159 = vpack.c.b16 %v1819, %v1818
        %v2160 = vpack.c.b16 %v1821, %v1820
        %v2161 = vpack.c.b16 %v1823, %v1822
        %v2162 = vpack.c.b16 %v1825, %v1824
        %v2163 = vpack.c.b16 %v1827, %v1826
        %v2164 = vpack.c.b16 %v1829, %v1828
        %v2165 = vpack.c.b16 %v1831, %v1830
        %v2166 = vpack.c.b16 %v1833, %v1832
        %v2167 = vpack.c.b16 %v1835, %v1834
        %v2168 = vpack.c.b16 %v1837, %v1836
        %v2169 = vpack.c.b16 %v1839, %v1838
        %v2170 = vpack.c.b16 %v1841, %v1840
        %v2171 = vpack.c.b16 %v1843, %v1842
        %v2172 = vpack.c.b16 %v1845, %v1844
        %v2173 = vpack.c.b16 %v1847, %v1846
        %v2174 = vpack.c.b16 %v1849, %v1848
        %v2175 = vpack.c.b16 %v1851, %v1850
        %v2176 = vpack.c.b16 %v1853, %v1852
        %v2177 = vpack.c.b16 %v1855, %v1854
        %v2178 = vpack.c.b16 %v1857, %v1856
        %v2179 = vpack.c.b16 %v1859, %v1858
        %v2180 = vpack.c.b16 %v1861, %v1860
        %v2181 = vpack.c.b16 %v1863, %v1862
        %v2182 = vpack.c.b16 %v1865, %v1864
        %v2183 = vpack.c.b16 %v1867, %v1866
        %v2184 = vpack.c.b16 %v1869, %v1868
        %v2185 = vpack.c.b16 %v1871, %v1870
        %v2186 = vpack.c.b16 %v1873, %v1872
        %v2187 = vpack.c.b16 %v1875, %v1874
        %v2188 = vpack.c.b16 %v1877, %v1876
        %v2189 = vpack.c.b16 %v1879, %v1878
        %v2190 = vpack.c.b16 %v1881, %v1880
        %v2191 = vpack.c.b16 %v1883, %v1882
        %v2192 = vpack.c.b16 %v1885, %v1884
        %v2193 = vpack.c.b16 %v1887, %v1886
        %v2194 = vpack.c.b16 %v1889, %v1888
        %v2195 = vpack.c.b16 %v1891, %v1890
        %v2196 = vpack.c.b16 %v1893, %v1892
        %v2197 = vpack.c.b16 %v1895, %v1894
        %v2198 = vpack.c.b16 %v1897, %v1896
        %v2199 = vpack.c.b16 %v1899, %v1898
        %v2200 = vpack.c.b16 %v1901, %v1900
        %v2201 = vpack.c.b16 %v1903, %v1902
        %v2202 = vpack.c.b16 %v1905, %v1904
        %v2203 = vpack.c.b16 %v1907, %v1906
        %v2204 = vpack.c.b16 %v1909, %v1908
        %v2205 = vpack.c.b16 %v1911, %v1910
        %v2206 = vpack.c.b16 %v1913, %v1912
        %v2207 = vpack.c.b16 %v1915, %v1914
        %v2208 = vpack.c.b16 %v1917, %v1916
        %v2209 = vpack.c.b16 %v1919, %v1918
        %v2210 = vpack.c.b16 %v1921, %v1920
        %v2211 = vpack.c.b16 %v1923, %v1922
        %v2212 = vpack.c.b16 %v1925, %v1924
        %v2213 = vpack.c.b16 %v1927, %v1926
        %v2214 = vpack.c.b16 %v1929, %v1928
        %v2215 = vpack.c.b16 %v1931, %v1930
        %v2216 = vpack.c.b16 %v1933, %v1932
        %v2217 = vpack.c.b16 %v1935, %v1934
        %v2218 = vpack.c.b16 %v1937, %v1936
        %v2219 = vpack.c.b16 %v1939, %v1938
        %v2220 = vpack.c.b16 %v1941, %v1940
        %v2221 = vpack.c.b16 %v1943, %v1942
        %v2222 = vpack.c.b16 %v1945, %v1944
        %v2223 = vpack.c.b16 %v1947, %v1946
        %v2224 = vpack.c.b16 %v1949, %v1948
        %v2225 = vpack.c.b16 %v1951, %v1950
        %v2226 = vpack.c.b16 %v1953, %v1952
        %v2227 = vpack.c.b16 %v1955, %v1954
        %v2228 = vpack.c.b16 %v1957, %v1956
        %v2229 = vpack.c.b16 %v1959, %v1958
        %v2230 = vpack.c.b16 %v1961, %v1960
        %v2231 = vpack.c.b16 %v1963, %v1962
        %v2232 = vpack.c.b16 %v1965, %v1964
        %v2233 = vpack.c.b16 %v1967, %v1966
        %v2234 = vpack.c.b16 %v1969, %v1968
        %v2235 = vpack.c.b16 %v1971, %v1970
        %v2236 = vpack.c.b16 %v1973, %v1972
        %v2237 = vpack.c.b16 %v1975, %v1974
        %v2238 = vpack.c.b16 %v1977, %v1976
        %v2239 = vpack.c.b16 %v1979, %v1978
        %v2240 = vpack.c.b16 %v1981, %v1980
        %v2241 = vpack.c.b16 %v1983, %v1982
        %v2242 = vpack.c.b16 %v1985, %v1984
        %v2243 = vpack.c.b16 %v1987, %v1986
        %2500 = vmatprep.subr.bf16.mxu0 0
        %2501 = vmatpush1.bf16.msra.mxu0 %v1988
        %2502 = vmatprep.subr.bf16.mxu0 0
        %2503 = vmatpush1.bf16.msra.mxu0 %v1989
        %2504 = vmatprep.subr.bf16.mxu0 0
        %2505 = vmatpush1.bf16.msra.mxu0 %v1990
        %2506 = vmatprep.subr.bf16.mxu0 0
        %2507 = vmatpush1.bf16.msra.mxu0 %v1991
        %2508 = vmatprep.subr.bf16.mxu0 0
        %2509 = vmatpush1.bf16.msra.mxu0 %v1992
        %2510 = vmatprep.subr.bf16.mxu0 0
        %2511 = vmatpush1.bf16.msra.mxu0 %v1993
        %2512 = vmatprep.subr.bf16.mxu0 0
        %2513 = vmatpush1.bf16.msra.mxu0 %v1994
        %2514 = vmatprep.subr.bf16.mxu0 0
        %2515 = vmatpush1.bf16.msra.mxu0 %v1995
        %2516 = vmatprep.subr.bf16.mxu0 0
        %2517 = vmatpush1.bf16.msra.mxu0 %v1996
        %2518 = vmatprep.subr.bf16.mxu0 0
        %2519 = vmatpush1.bf16.msra.mxu0 %v1997
        %2520 = vmatprep.subr.bf16.mxu0 0
        %2521 = vmatpush1.bf16.msra.mxu0 %v1998
        %2522 = vmatprep.subr.bf16.mxu0 0
        %2523 = vmatpush1.bf16.msra.mxu0 %v1999
        %2524 = vmatprep.subr.bf16.mxu0 0
        %2525 = vmatpush1.bf16.msra.mxu0 %v2000
        %2526 = vmatprep.subr.bf16.mxu0 0
        %2527 = vmatpush1.bf16.msra.mxu0 %v2001
        %2528 = vmatprep.subr.bf16.mxu0 0
        %2529 = vmatpush1.bf16.msra.mxu0 %v2002
        %2530 = vmatprep.subr.bf16.mxu0 0
        %2531 = vmatpush1.bf16.msra.mxu0 %v2003
        %2532 = vmatprep.mubr.bf16.mxu0 %v773
        %2533 = vmatmul.mubr.bf16.gmra.mrb[0].mxu0 %v759
        %v2534 = vpop.f32.mrb[0].mxu0
        %v2535 = vadd.f32 0.0, %v2534
        %v2536 = vpop.f32.mrb[0].mxu0
        %v2537 = vpop.f32.mrb[0].mxu0
        %v2538 = vpop.f32.mrb[0].mxu0
        %2539 = vdwg.mxu0
        %2540 = vmatprep.subr.bf16.mxu0 0
        %2541 = vmatpush1.bf16.msra.mxu0 %v2004
        %2542 = vmatprep.subr.bf16.mxu0 0
        %2543 = vmatpush1.bf16.msra.mxu0 %v2005
        %2544 = vmatprep.subr.bf16.mxu0 0
        %2545 = vmatpush1.bf16.msra.mxu0 %v2006
        %2546 = vmatprep.subr.bf16.mxu0 0
        %2547 = vmatpush1.bf16.msra.mxu0 %v2007
        %2548 = vmatprep.subr.bf16.mxu0 0
        %2549 = vmatpush1.bf16.msra.mxu0 %v2008
        %2550 = vmatprep.subr.bf16.mxu0 0
        %2551 = vmatpush1.bf16.msra.mxu0 %v2009
        %2552 = vmatprep.subr.bf16.mxu0 0
        %2553 = vmatpush1.bf16.msra.mxu0 %v2010
        %2554 = vmatprep.subr.bf16.mxu0 0
        %2555 = vmatpush1.bf16.msra.mxu0 %v2011
        %2556 = vmatprep.subr.bf16.mxu0 0
        %2557 = vmatpush1.bf16.msra.mxu0 %v2012
        %2558 = vmatprep.subr.bf16.mxu0 0
        %2559 = vmatpush1.bf16.msra.mxu0 %v2013
        %2560 = vmatprep.subr.bf16.mxu0 0
        %2561 = vmatpush1.bf16.msra.mxu0 %v2014
        %2562 = vmatprep.subr.bf16.mxu0 0
        %2563 = vmatpush1.bf16.msra.mxu0 %v2015
        %2564 = vmatprep.subr.bf16.mxu0 0
        %2565 = vmatpush1.bf16.msra.mxu0 %v2016
        %2566 = vmatprep.subr.bf16.mxu0 0
        %2567 = vmatpush1.bf16.msra.mxu0 %v2017
        %2568 = vmatprep.subr.bf16.mxu0 0
        %2569 = vmatpush1.bf16.msra.mxu0 %v2018
        %2570 = vmatprep.subr.bf16.mxu0 0
        %2571 = vmatpush1.bf16.msra.mxu0 %v2019
        %2572 = vmatprep.mubr.bf16.mxu0 %v783
        %2573 = vmatmul.mubr.bf16.gmra.mrb[0].mxu0 %v781
        %v2574 = vpop.f32.mrb[0].mxu0
        %v2575 = vadd.f32 %v2535, %v2574
        %v2576 = vpop.f32.mrb[0].mxu0
        %v2577 = vpop.f32.mrb[0].mxu0
        %v2578 = vpop.f32.mrb[0].mxu0
        %2579 = vdwg.mxu0
        %2580 = vmatprep.subr.bf16.mxu0 0
        %2581 = vmatpush1.bf16.msra.mxu0 %v2020
        %2582 = vmatprep.subr.bf16.mxu0 0
        %2583 = vmatpush1.bf16.msra.mxu0 %v2021
        %2584 = vmatprep.subr.bf16.mxu0 0
        %2585 = vmatpush1.bf16.msra.mxu0 %v2022
        %2586 = vmatprep.subr.bf16.mxu0 0
        %2587 = vmatpush1.bf16.msra.mxu0 %v2023
        %2588 = vmatprep.subr.bf16.mxu0 0
        %2589 = vmatpush1.bf16.msra.mxu0 %v2024
        %2590 = vmatprep.subr.bf16.mxu0 0
        %2591 = vmatpush1.bf16.msra.mxu0 %v2025
        %2592 = vmatprep.subr.bf16.mxu0 0
        %2593 = vmatpush1.bf16.msra.mxu0 %v2026
        %2594 = vmatprep.subr.bf16.mxu0 0
        %2595 = vmatpush1.bf16.msra.mxu0 %v2027
        %2596 = vmatprep.subr.bf16.mxu0 0
        %2597 = vmatpush1.bf16.msra.mxu0 %v2028
        %2598 = vmatprep.subr.bf16.mxu0 0
        %2599 = vmatpush1.bf16.msra.mxu0 %v2029
        %2600 = vmatprep.subr.bf16.mxu0 0
        %2601 = vmatpush1.bf16.msra.mxu0 %v2030
        %2602 = vmatprep.subr.bf16.mxu0 0
        %2603 = vmatpush1.bf16.msra.mxu0 %v2031
        %2604 = vmatprep.subr.bf16.mxu0 0
        %2605 = vmatpush1.bf16.msra.mxu0 %v2032
        %2606 = vmatprep.subr.bf16.mxu0 0
        %2607 = vmatpush1.bf16.msra.mxu0 %v2033
        %2608 = vmatprep.subr.bf16.mxu0 0
        %2609 = vmatpush1.bf16.msra.mxu0 %v2034
        %2610 = vmatprep.subr.bf16.mxu0 0
        %2611 = vmatpush1.bf16.msra.mxu0 %v2035
        %2612 = vmatprep.mubr.bf16.mxu0 %v780
        %2613 = vmatmul.mubr.bf16.gmra.mrb[0].mxu0 %v766
        %v2614 = vpop.f32.mrb[0].mxu0
        %v2615 = vadd.f32 %v2575, %v2614
        %v2616 = vpop.f32.mrb[0].mxu0
        %v2617 = vpop.f32.mrb[0].mxu0
        %v2618 = vpop.f32.mrb[0].mxu0
        %2619 = vdwg.mxu0
        %2620 = vmatprep.subr.bf16.mxu0 0
        %2621 = vmatpush1.bf16.msra.mxu0 %v2036
        %2622 = vmatprep.subr.bf16.mxu0 0
        %2623 = vmatpush1.bf16.msra.mxu0 %v2037
        %2624 = vmatprep.subr.bf16.mxu0 0
        %2625 = vmatpush1.bf16.msra.mxu0 %v2038
        %2626 = vmatprep.subr.bf16.mxu0 0
        %2627 = vmatpush1.bf16.msra.mxu0 %v2039
        %2628 = vmatprep.subr.bf16.mxu0 0
        %2629 = vmatpush1.bf16.msra.mxu0 %v2040
        %2630 = vmatprep.subr.bf16.mxu0 0
        %2631 = vmatpush1.bf16.msra.mxu0 %v2041
        %2632 = vmatprep.subr.bf16.mxu0 0
        %2633 = vmatpush1.bf16.msra.mxu0 %v2042
        %2634 = vmatprep.subr.bf16.mxu0 0
        %2635 = vmatpush1.bf16.msra.mxu0 %v2043
        %2636 = vmatprep.subr.bf16.mxu0 0
        %2637 = vmatpush1.bf16.msra.mxu0 %v2044
        %2638 = vmatprep.subr.bf16.mxu0 0
        %2639 = vmatpush1.bf16.msra.mxu0 %v2045
        %2640 = vmatprep.subr.bf16.mxu0 0
        %2641 = vmatpush1.bf16.msra.mxu0 %v2046
        %2642 = vmatprep.subr.bf16.mxu0 0
        %2643 = vmatpush1.bf16.msra.mxu0 %v2047
        %2644 = vmatprep.subr.bf16.mxu0 0
        %2645 = vmatpush1.bf16.msra.mxu0 %v2048
        %2646 = vmatprep.subr.bf16.mxu0 0
        %2647 = vmatpush1.bf16.msra.mxu0 %v2049
        %2648 = vmatprep.subr.bf16.mxu0 0
        %2649 = vmatpush1.bf16.msra.mxu0 %v2050
        %2650 = vmatprep.subr.bf16.mxu0 0
        %2651 = vmatpush1.bf16.msra.mxu0 %v2051
        %2652 = vmatprep.mubr.bf16.mxu0 %v784
        %2653 = vmatmul.mubr.bf16.gmra.mrb[0].mxu0 %v782
        %v2654 = vpop.f32.mrb[0].mxu0
        %v2655 = vadd.f32 %v2615, %v2654
        %v2656 = vpop.f32.mrb[0].mxu0
        %v2657 = vpop.f32.mrb[0].mxu0
        %v2658 = vpop.f32.mrb[0].mxu0
        %2659 = vdwg.mxu0
        %2660 = vmatprep.subr.bf16.mxu0 0
        %2661 = vmatpush1.bf16.msra.mxu0 %v2052
        %2662 = vmatprep.subr.bf16.mxu0 0
        %2663 = vmatpush1.bf16.msra.mxu0 %v2053
        %2664 = vmatprep.subr.bf16.mxu0 0
        %2665 = vmatpush1.bf16.msra.mxu0 %v2054
        %2666 = vmatprep.subr.bf16.mxu0 0
        %2667 = vmatpush1.bf16.msra.mxu0 %v2055
        %2668 = vmatprep.subr.bf16.mxu0 0
        %2669 = vmatpush1.bf16.msra.mxu0 %v2056
        %2670 = vmatprep.subr.bf16.mxu0 0
        %2671 = vmatpush1.bf16.msra.mxu0 %v2057
        %2672 = vmatprep.subr.bf16.mxu0 0
        %2673 = vmatpush1.bf16.msra.mxu0 %v2058
        %2674 = vmatprep.subr.bf16.mxu0 0
        %2675 = vmatpush1.bf16.msra.mxu0 %v2059
        %2676 = vmatprep.subr.bf16.mxu0 0
        %2677 = vmatpush1.bf16.msra.mxu0 %v2060
        %2678 = vmatprep.subr.bf16.mxu0 0
        %2679 = vmatpush1.bf16.msra.mxu0 %v2061
        %2680 = vmatprep.subr.bf16.mxu0 0
        %2681 = vmatpush1.bf16.msra.mxu0 %v2062
        %2682 = vmatprep.subr.bf16.mxu0 0
        %2683 = vmatpush1.bf16.msra.mxu0 %v2063
        %2684 = vmatprep.subr.bf16.mxu0 0
        %2685 = vmatpush1.bf16.msra.mxu0 %v2064
        %2686 = vmatprep.subr.bf16.mxu0 0
        %2687 = vmatpush1.bf16.msra.mxu0 %v2065
        %2688 = vmatprep.subr.bf16.mxu0 0
        %2689 = vmatpush1.bf16.msra.mxu0 %v2066
        %2690 = vmatprep.subr.bf16.mxu0 0
        %2691 = vmatpush1.bf16.msra.mxu0 %v2067
        %2692 = vmatprep.mubr.bf16.mxu0 %v822
        %2693 = vmatmul.mubr.bf16.gmra.mrb[0].mxu0 %v808
        %v2694 = vpop.f32.mrb[0].mxu0
        %v2695 = vadd.f32 %v2655, %v2694
        %v2696 = vpop.f32.mrb[0].mxu0
        %v2697 = vpop.f32.mrb[0].mxu0
        %v2698 = vpop.f32.mrb[0].mxu0
        %2699 = vdwg.mxu0
        %2700 = vmatprep.subr.bf16.mxu0 0
        %2701 = vmatpush1.bf16.msra.mxu0 %v2068
        %2702 = vmatprep.subr.bf16.mxu0 0
        %2703 = vmatpush1.bf16.msra.mxu0 %v2069
        %2704 = vmatprep.subr.bf16.mxu0 0
        %2705 = vmatpush1.bf16.msra.mxu0 %v2070
        %2706 = vmatprep.subr.bf16.mxu0 0
        %2707 = vmatpush1.bf16.msra.mxu0 %v2071
        %2708 = vmatprep.subr.bf16.mxu0 0
        %2709 = vmatpush1.bf16.msra.mxu0 %v2072
        %2710 = vmatprep.subr.bf16.mxu0 0
        %2711 = vmatpush1.bf16.msra.mxu0 %v2073
        %2712 = vmatprep.subr.bf16.mxu0 0
        %2713 = vmatpush1.bf16.msra.mxu0 %v2074
        %2714 = vmatprep.subr.bf16.mxu0 0
        %2715 = vmatpush1.bf16.msra.mxu0 %v2075
        %2716 = vmatprep.subr.bf16.mxu0 0
        %2717 = vmatpush1.bf16.msra.mxu0 %v2076
        %2718 = vmatprep.subr.bf16.mxu0 0
        %2719 = vmatpush1.bf16.msra.mxu0 %v2077
        %2720 = vmatprep.subr.bf16.mxu0 0
        %2721 = vmatpush1.bf16.msra.mxu0 %v2078
        %2722 = vmatprep.subr.bf16.mxu0 0
        %2723 = vmatpush1.bf16.msra.mxu0 %v2079
        %2724 = vmatprep.subr.bf16.mxu0 0
        %2725 = vmatpush1.bf16.msra.mxu0 %v2080
        %2726 = vmatprep.subr.bf16.mxu0 0
        %2727 = vmatpush1.bf16.msra.mxu0 %v2081
        %2728 = vmatprep.subr.bf16.mxu0 0
        %2729 = vmatpush1.bf16.msra.mxu0 %v2082
        %2730 = vmatprep.subr.bf16.mxu0 0
        %2731 = vmatpush1.bf16.msra.mxu0 %v2083
        %2732 = vmatprep.mubr.bf16.mxu0 %v832
        %2733 = vmatmul.mubr.bf16.gmra.mrb[0].mxu0 %v830
        %v2734 = vpop.f32.mrb[0].mxu0
        %v2735 = vadd.f32 %v2695, %v2734
        %v2736 = vpop.f32.mrb[0].mxu0
        %v2737 = vpop.f32.mrb[0].mxu0
        %v2738 = vpop.f32.mrb[0].mxu0
        %2739 = vdwg.mxu0
        %2740 = vmatprep.subr.bf16.mxu0 0
        %2741 = vmatpush1.bf16.msra.mxu0 %v2084
        %2742 = vmatprep.subr.bf16.mxu0 0
        %2743 = vmatpush1.bf16.msra.mxu0 %v2085
        %2744 = vmatprep.subr.bf16.mxu0 0
        %2745 = vmatpush1.bf16.msra.mxu0 %v2086
        %2746 = vmatprep.subr.bf16.mxu0 0
        %2747 = vmatpush1.bf16.msra.mxu0 %v2087
        %2748 = vmatprep.subr.bf16.mxu0 0
        %2749 = vmatpush1.bf16.msra.mxu0 %v2088
        %2750 = vmatprep.subr.bf16.mxu0 0
        %2751 = vmatpush1.bf16.msra.mxu0 %v2089
        %2752 = vmatprep.subr.bf16.mxu0 0
        %2753 = vmatpush1.bf16.msra.mxu0 %v2090
        %2754 = vmatprep.subr.bf16.mxu0 0
        %2755 = vmatpush1.bf16.msra.mxu0 %v2091
        %2756 = vmatprep.subr.bf16.mxu0 0
        %2757 = vmatpush1.bf16.msra.mxu0 %v2092
        %2758 = vmatprep.subr.bf16.mxu0 0
        %2759 = vmatpush1.bf16.msra.mxu0 %v2093
        %2760 = vmatprep.subr.bf16.mxu0 0
        %2761 = vmatpush1.bf16.msra.mxu0 %v2094
        %2762 = vmatprep.subr.bf16.mxu0 0
        %2763 = vmatpush1.bf16.msra.mxu0 %v2095
        %2764 = vmatprep.subr.bf16.mxu0 0
        %2765 = vmatpush1.bf16.msra.mxu0 %v2096
        %2766 = vmatprep.subr.bf16.mxu0 0
        %2767 = vmatpush1.bf16.msra.mxu0 %v2097
        %2768 = vmatprep.subr.bf16.mxu0 0
        %2769 = vmatpush1.bf16.msra.mxu0 %v2098
        %2770 = vmatprep.subr.bf16.mxu0 0
        %2771 = vmatpush1.bf16.msra.mxu0 %v2099
        %2772 = vmatprep.mubr.bf16.mxu0 %v829
        %2773 = vmatmul.mubr.bf16.gmra.mrb[0].mxu0 %v815
        %v2774 = vpop.f32.mrb[0].mxu0
        %v2775 = vadd.f32 %v2735, %v2774
        %v2776 = vpop.f32.mrb[0].mxu0
        %v2777 = vpop.f32.mrb[0].mxu0
        %v2778 = vpop.f32.mrb[0].mxu0
        %2779 = vdwg.mxu0
        %2780 = vmatprep.subr.bf16.mxu0 0
        %2781 = vmatpush1.bf16.msra.mxu0 %v2100
        %2782 = vmatprep.subr.bf16.mxu0 0
        %2783 = vmatpush1.bf16.msra.mxu0 %v2101
        %2784 = vmatprep.subr.bf16.mxu0 0
        %2785 = vmatpush1.bf16.msra.mxu0 %v2102
        %2786 = vmatprep.subr.bf16.mxu0 0
        %2787 = vmatpush1.bf16.msra.mxu0 %v2103
        %2788 = vmatprep.subr.bf16.mxu0 0
        %2789 = vmatpush1.bf16.msra.mxu0 %v2104
        %2790 = vmatprep.subr.bf16.mxu0 0
        %2791 = vmatpush1.bf16.msra.mxu0 %v2105
        %2792 = vmatprep.subr.bf16.mxu0 0
        %2793 = vmatpush1.bf16.msra.mxu0 %v2106
        %2794 = vmatprep.subr.bf16.mxu0 0
        %2795 = vmatpush1.bf16.msra.mxu0 %v2107
        %2796 = vmatprep.subr.bf16.mxu0 0
        %2797 = vmatpush1.bf16.msra.mxu0 %v2108
        %2798 = vmatprep.subr.bf16.mxu0 0
        %2799 = vmatpush1.bf16.msra.mxu0 %v2109
        %2800 = vmatprep.subr.bf16.mxu0 0
        %2801 = vmatpush1.bf16.msra.mxu0 %v2110
        %2802 = vmatprep.subr.bf16.mxu0 0
        %2803 = vmatpush1.bf16.msra.mxu0 %v2111
        %2804 = vmatprep.subr.bf16.mxu0 0
        %2805 = vmatpush1.bf16.msra.mxu0 %v2112
        %2806 = vmatprep.subr.bf16.mxu0 0
        %2807 = vmatpush1.bf16.msra.mxu0 %v2113
        %2808 = vmatprep.subr.bf16.mxu0 0
        %2809 = vmatpush1.bf16.msra.mxu0 %v2114
        %2810 = vmatprep.subr.bf16.mxu0 0
        %2811 = vmatpush1.bf16.msra.mxu0 %v2115
        %2812 = vmatprep.mubr.bf16.mxu0 %v833
        %2813 = vmatmul.mubr.bf16.gmra.mrb[0].mxu0 %v831
        %v2814 = vpop.f32.mrb[0].mxu0
        %v2815 = vadd.f32 %v2775, %v2814
        %v2816 = vpop.f32.mrb[0].mxu0
        %v2817 = vpop.f32.mrb[0].mxu0
        %v2818 = vpop.f32.mrb[0].mxu0
        %2819 = vdwg.mxu0
        %2820 = vmatprep.subr.bf16.mxu0 0
        %2821 = vmatpush1.bf16.msra.mxu0 %v2116
        %2822 = vmatprep.subr.bf16.mxu0 0
        %2823 = vmatpush1.bf16.msra.mxu0 %v2117
        %2824 = vmatprep.subr.bf16.mxu0 0
        %2825 = vmatpush1.bf16.msra.mxu0 %v2118
        %2826 = vmatprep.subr.bf16.mxu0 0
        %2827 = vmatpush1.bf16.msra.mxu0 %v2119
        %2828 = vmatprep.subr.bf16.mxu0 0
        %2829 = vmatpush1.bf16.msra.mxu0 %v2120
        %2830 = vmatprep.subr.bf16.mxu0 0
        %2831 = vmatpush1.bf16.msra.mxu0 %v2121
        %2832 = vmatprep.subr.bf16.mxu0 0
        %2833 = vmatpush1.bf16.msra.mxu0 %v2122
        %2834 = vmatprep.subr.bf16.mxu0 0
        %2835 = vmatpush1.bf16.msra.mxu0 %v2123
        %2836 = vmatprep.subr.bf16.mxu0 0
        %2837 = vmatpush1.bf16.msra.mxu0 %v2124
        %2838 = vmatprep.subr.bf16.mxu0 0
        %2839 = vmatpush1.bf16.msra.mxu0 %v2125
        %2840 = vmatprep.subr.bf16.mxu0 0
        %2841 = vmatpush1.bf16.msra.mxu0 %v2126
        %2842 = vmatprep.subr.bf16.mxu0 0
        %2843 = vmatpush1.bf16.msra.mxu0 %v2127
        %2844 = vmatprep.subr.bf16.mxu0 0
        %2845 = vmatpush1.bf16.msra.mxu0 %v2128
        %2846 = vmatprep.subr.bf16.mxu0 0
        %2847 = vmatpush1.bf16.msra.mxu0 %v2129
        %2848 = vmatprep.subr.bf16.mxu0 0
        %2849 = vmatpush1.bf16.msra.mxu0 %v2130
        %2850 = vmatprep.subr.bf16.mxu0 0
        %2851 = vmatpush1.bf16.msra.mxu0 %v2131
        %2852 = vmatprep.mubr.bf16.mxu0 %v871
        %2853 = vmatmul.mubr.bf16.gmra.mrb[0].mxu0 %v857
        %v2854 = vpop.f32.mrb[0].mxu0
        %v2855 = vadd.f32 %v2815, %v2854
        %v2856 = vpop.f32.mrb[0].mxu0
        %v2857 = vpop.f32.mrb[0].mxu0
        %v2858 = vpop.f32.mrb[0].mxu0
        %2859 = vdwg.mxu0
        %2860 = vmatprep.subr.bf16.mxu0 0
        %2861 = vmatpush1.bf16.msra.mxu0 %v2132
        %2862 = vmatprep.subr.bf16.mxu0 0
        %2863 = vmatpush1.bf16.msra.mxu0 %v2133
        %2864 = vmatprep.subr.bf16.mxu0 0
        %2865 = vmatpush1.bf16.msra.mxu0 %v2134
        %2866 = vmatprep.subr.bf16.mxu0 0
        %2867 = vmatpush1.bf16.msra.mxu0 %v2135
        %2868 = vmatprep.subr.bf16.mxu0 0
        %2869 = vmatpush1.bf16.msra.mxu0 %v2136
        %2870 = vmatprep.subr.bf16.mxu0 0
        %2871 = vmatpush1.bf16.msra.mxu0 %v2137
        %2872 = vmatprep.subr.bf16.mxu0 0
        %2873 = vmatpush1.bf16.msra.mxu0 %v2138
        %2874 = vmatprep.subr.bf16.mxu0 0
        %2875 = vmatpush1.bf16.msra.mxu0 %v2139
        %2876 = vmatprep.subr.bf16.mxu0 0
        %2877 = vmatpush1.bf16.msra.mxu0 %v2140
        %2878 = vmatprep.subr.bf16.mxu0 0
        %2879 = vmatpush1.bf16.msra.mxu0 %v2141
        %2880 = vmatprep.subr.bf16.mxu0 0
        %2881 = vmatpush1.bf16.msra.mxu0 %v2142
        %2882 = vmatprep.subr.bf16.mxu0 0
        %2883 = vmatpush1.bf16.msra.mxu0 %v2143
        %2884 = vmatprep.subr.bf16.mxu0 0
        %2885 = vmatpush1.bf16.msra.mxu0 %v2144
        %2886 = vmatprep.subr.bf16.mxu0 0
        %2887 = vmatpush1.bf16.msra.mxu0 %v2145
        %2888 = vmatprep.subr.bf16.mxu0 0
        %2889 = vmatpush1.bf16.msra.mxu0 %v2146
        %2890 = vmatprep.subr.bf16.mxu0 0
        %2891 = vmatpush1.bf16.msra.mxu0 %v2147
        %2892 = vmatprep.mubr.bf16.mxu0 %v881
        %2893 = vmatmul.mubr.bf16.gmra.mrb[0].mxu0 %v879
        %v2894 = vpop.f32.mrb[0].mxu0
        %v2895 = vadd.f32 %v2855, %v2894
        %v2896 = vpop.f32.mrb[0].mxu0
        %v2897 = vpop.f32.mrb[0].mxu0
        %v2898 = vpop.f32.mrb[0].mxu0
        %2899 = vdwg.mxu0
        %2900 = vmatprep.subr.bf16.mxu0 0
        %2901 = vmatpush1.bf16.msra.mxu0 %v2148
        %2902 = vmatprep.subr.bf16.mxu0 0
        %2903 = vmatpush1.bf16.msra.mxu0 %v2149
        %2904 = vmatprep.subr.bf16.mxu0 0
        %2905 = vmatpush1.bf16.msra.mxu0 %v2150
        %2906 = vmatprep.subr.bf16.mxu0 0
        %2907 = vmatpush1.bf16.msra.mxu0 %v2151
        %2908 = vmatprep.subr.bf16.mxu0 0
        %2909 = vmatpush1.bf16.msra.mxu0 %v2152
        %2910 = vmatprep.subr.bf16.mxu0 0
        %2911 = vmatpush1.bf16.msra.mxu0 %v2153
        %2912 = vmatprep.subr.bf16.mxu0 0
        %2913 = vmatpush1.bf16.msra.mxu0 %v2154
        %2914 = vmatprep.subr.bf16.mxu0 0
        %2915 = vmatpush1.bf16.msra.mxu0 %v2155
        %2916 = vmatprep.subr.bf16.mxu0 0
        %2917 = vmatpush1.bf16.msra.mxu0 %v2156
        %2918 = vmatprep.subr.bf16.mxu0 0
        %2919 = vmatpush1.bf16.msra.mxu0 %v2157
        %2920 = vmatprep.subr.bf16.mxu0 0
        %2921 = vmatpush1.bf16.msra.mxu0 %v2158
        %2922 = vmatprep.subr.bf16.mxu0 0
        %2923 = vmatpush1.bf16.msra.mxu0 %v2159
        %2924 = vmatprep.subr.bf16.mxu0 0
        %2925 = vmatpush1.bf16.msra.mxu0 %v2160
        %2926 = vmatprep.subr.bf16.mxu0 0
        %2927 = vmatpush1.bf16.msra.mxu0 %v2161
        %2928 = vmatprep.subr.bf16.mxu0 0
        %2929 = vmatpush1.bf16.msra.mxu0 %v2162
        %2930 = vmatprep.subr.bf16.mxu0 0
        %2931 = vmatpush1.bf16.msra.mxu0 %v2163
        %2932 = vmatprep.mubr.bf16.mxu0 %v878
        %2933 = vmatmul.mubr.bf16.gmra.mrb[0].mxu0 %v864
        %v2934 = vpop.f32.mrb[0].mxu0
        %v2935 = vadd.f32 %v2895, %v2934
        %v2936 = vpop.f32.mrb[0].mxu0
        %v2937 = vpop.f32.mrb[0].mxu0
        %v2938 = vpop.f32.mrb[0].mxu0
        %2939 = vdwg.mxu0
        %2940 = vmatprep.subr.bf16.mxu0 0
        %2941 = vmatpush1.bf16.msra.mxu0 %v2164
        %2942 = vmatprep.subr.bf16.mxu0 0
        %2943 = vmatpush1.bf16.msra.mxu0 %v2165
        %2944 = vmatprep.subr.bf16.mxu0 0
        %2945 = vmatpush1.bf16.msra.mxu0 %v2166
        %2946 = vmatprep.subr.bf16.mxu0 0
        %2947 = vmatpush1.bf16.msra.mxu0 %v2167
        %2948 = vmatprep.subr.bf16.mxu0 0
        %2949 = vmatpush1.bf16.msra.mxu0 %v2168
        %2950 = vmatprep.subr.bf16.mxu0 0
        %2951 = vmatpush1.bf16.msra.mxu0 %v2169
        %2952 = vmatprep.subr.bf16.mxu0 0
        %2953 = vmatpush1.bf16.msra.mxu0 %v2170
        %2954 = vmatprep.subr.bf16.mxu0 0
        %2955 = vmatpush1.bf16.msra.mxu0 %v2171
        %2956 = vmatprep.subr.bf16.mxu0 0
        %2957 = vmatpush1.bf16.msra.mxu0 %v2172
        %2958 = vmatprep.subr.bf16.mxu0 0
        %2959 = vmatpush1.bf16.msra.mxu0 %v2173
        %2960 = vmatprep.subr.bf16.mxu0 0
        %2961 = vmatpush1.bf16.msra.mxu0 %v2174
        %2962 = vmatprep.subr.bf16.mxu0 0
        %2963 = vmatpush1.bf16.msra.mxu0 %v2175
        %2964 = vmatprep.subr.bf16.mxu0 0
        %2965 = vmatpush1.bf16.msra.mxu0 %v2176
        %2966 = vmatprep.subr.bf16.mxu0 0
        %2967 = vmatpush1.bf16.msra.mxu0 %v2177
        %2968 = vmatprep.subr.bf16.mxu0 0
        %2969 = vmatpush1.bf16.msra.mxu0 %v2178
        %2970 = vmatprep.subr.bf16.mxu0 0
        %2971 = vmatpush1.bf16.msra.mxu0 %v2179
        %2972 = vmatprep.mubr.bf16.mxu0 %v882
        %2973 = vmatmul.mubr.bf16.gmra.mrb[0].mxu0 %v880
        %v2974 = vpop.f32.mrb[0].mxu0
        %v2975 = vadd.f32 %v2935, %v2974
        %v2976 = vpop.f32.mrb[0].mxu0
        %v2977 = vpop.f32.mrb[0].mxu0
        %v2978 = vpop.f32.mrb[0].mxu0
        %2979 = vdwg.mxu0
        %2980 = vmatprep.subr.bf16.mxu0 0
        %2981 = vmatpush1.bf16.msra.mxu0 %v2180
        %2982 = vmatprep.subr.bf16.mxu0 0
        %2983 = vmatpush1.bf16.msra.mxu0 %v2181
        %2984 = vmatprep.subr.bf16.mxu0 0
        %2985 = vmatpush1.bf16.msra.mxu0 %v2182
        %2986 = vmatprep.subr.bf16.mxu0 0
        %2987 = vmatpush1.bf16.msra.mxu0 %v2183
        %2988 = vmatprep.subr.bf16.mxu0 0
        %2989 = vmatpush1.bf16.msra.mxu0 %v2184
        %2990 = vmatprep.subr.bf16.mxu0 0
        %2991 = vmatpush1.bf16.msra.mxu0 %v2185
        %2992 = vmatprep.subr.bf16.mxu0 0
        %2993 = vmatpush1.bf16.msra.mxu0 %v2186
        %2994 = vmatprep.subr.bf16.mxu0 0
        %2995 = vmatpush1.bf16.msra.mxu0 %v2187
        %2996 = vmatprep.subr.bf16.mxu0 0
        %2997 = vmatpush1.bf16.msra.mxu0 %v2188
        %2998 = vmatprep.subr.bf16.mxu0 0
        %2999 = vmatpush1.bf16.msra.mxu0 %v2189
        %3000 = vmatprep.subr.bf16.mxu0 0
        %3001 = vmatpush1.bf16.msra.mxu0 %v2190
        %3002 = vmatprep.subr.bf16.mxu0 0
        %3003 = vmatpush1.bf16.msra.mxu0 %v2191
        %3004 = vmatprep.subr.bf16.mxu0 0
        %3005 = vmatpush1.bf16.msra.mxu0 %v2192
        %3006 = vmatprep.subr.bf16.mxu0 0
        %3007 = vmatpush1.bf16.msra.mxu0 %v2193
        %3008 = vmatprep.subr.bf16.mxu0 0
        %3009 = vmatpush1.bf16.msra.mxu0 %v2194
        %3010 = vmatprep.subr.bf16.mxu0 0
        %3011 = vmatpush1.bf16.msra.mxu0 %v2195
        %3012 = vmatprep.mubr.bf16.mxu0 %v920
        %3013 = vmatmul.mubr.bf16.gmra.mrb[0].mxu0 %v906
        %v3014 = vpop.f32.mrb[0].mxu0
        %v3015 = vadd.f32 %v2975, %v3014
        %v3016 = vpop.f32.mrb[0].mxu0
        %v3017 = vpop.f32.mrb[0].mxu0
        %v3018 = vpop.f32.mrb[0].mxu0
        %3019 = vdwg.mxu0
        %3020 = vmatprep.subr.bf16.mxu0 0
        %3021 = vmatpush1.bf16.msra.mxu0 %v2196
        %3022 = vmatprep.subr.bf16.mxu0 0
        %3023 = vmatpush1.bf16.msra.mxu0 %v2197
        %3024 = vmatprep.subr.bf16.mxu0 0
        %3025 = vmatpush1.bf16.msra.mxu0 %v2198
        %3026 = vmatprep.subr.bf16.mxu0 0
        %3027 = vmatpush1.bf16.msra.mxu0 %v2199
        %3028 = vmatprep.subr.bf16.mxu0 0
        %3029 = vmatpush1.bf16.msra.mxu0 %v2200
        %3030 = vmatprep.subr.bf16.mxu0 0
        %3031 = vmatpush1.bf16.msra.mxu0 %v2201
        %3032 = vmatprep.subr.bf16.mxu0 0
        %3033 = vmatpush1.bf16.msra.mxu0 %v2202
        %3034 = vmatprep.subr.bf16.mxu0 0
        %3035 = vmatpush1.bf16.msra.mxu0 %v2203
        %3036 = vmatprep.subr.bf16.mxu0 0
        %3037 = vmatpush1.bf16.msra.mxu0 %v2204
        %3038 = vmatprep.subr.bf16.mxu0 0
        %3039 = vmatpush1.bf16.msra.mxu0 %v2205
        %3040 = vmatprep.subr.bf16.mxu0 0
        %3041 = vmatpush1.bf16.msra.mxu0 %v2206
        %3042 = vmatprep.subr.bf16.mxu0 0
        %3043 = vmatpush1.bf16.msra.mxu0 %v2207
        %3044 = vmatprep.subr.bf16.mxu0 0
        %3045 = vmatpush1.bf16.msra.mxu0 %v2208
        %3046 = vmatprep.subr.bf16.mxu0 0
        %3047 = vmatpush1.bf16.msra.mxu0 %v2209
        %3048 = vmatprep.subr.bf16.mxu0 0
        %3049 = vmatpush1.bf16.msra.mxu0 %v2210
        %3050 = vmatprep.subr.bf16.mxu0 0
        %3051 = vmatpush1.bf16.msra.mxu0 %v2211
        %3052 = vmatprep.mubr.bf16.mxu0 %v930
        %3053 = vmatmul.mubr.bf16.gmra.mrb[0].mxu0 %v928
        %v3054 = vpop.f32.mrb[0].mxu0
        %v3055 = vadd.f32 %v3015, %v3054
        %v3056 = vpop.f32.mrb[0].mxu0
        %v3057 = vpop.f32.mrb[0].mxu0
        %v3058 = vpop.f32.mrb[0].mxu0
        %3059 = vdwg.mxu0
        %3060 = vmatprep.subr.bf16.mxu0 0
        %3061 = vmatpush1.bf16.msra.mxu0 %v2212
        %3062 = vmatprep.subr.bf16.mxu0 0
        %3063 = vmatpush1.bf16.msra.mxu0 %v2213
        %3064 = vmatprep.subr.bf16.mxu0 0
        %3065 = vmatpush1.bf16.msra.mxu0 %v2214
        %3066 = vmatprep.subr.bf16.mxu0 0
        %3067 = vmatpush1.bf16.msra.mxu0 %v2215
        %3068 = vmatprep.subr.bf16.mxu0 0
        %3069 = vmatpush1.bf16.msra.mxu0 %v2216
        %3070 = vmatprep.subr.bf16.mxu0 0
        %3071 = vmatpush1.bf16.msra.mxu0 %v2217
        %3072 = vmatprep.subr.bf16.mxu0 0
        %3073 = vmatpush1.bf16.msra.mxu0 %v2218
        %3074 = vmatprep.subr.bf16.mxu0 0
        %3075 = vmatpush1.bf16.msra.mxu0 %v2219
        %3076 = vmatprep.subr.bf16.mxu0 0
        %3077 = vmatpush1.bf16.msra.mxu0 %v2220
        %3078 = vmatprep.subr.bf16.mxu0 0
        %3079 = vmatpush1.bf16.msra.mxu0 %v2221
        %3080 = vmatprep.subr.bf16.mxu0 0
        %3081 = vmatpush1.bf16.msra.mxu0 %v2222
        %3082 = vmatprep.subr.bf16.mxu0 0
        %3083 = vmatpush1.bf16.msra.mxu0 %v2223
        %3084 = vmatprep.subr.bf16.mxu0 0
        %3085 = vmatpush1.bf16.msra.mxu0 %v2224
        %3086 = vmatprep.subr.bf16.mxu0 0
        %3087 = vmatpush1.bf16.msra.mxu0 %v2225
        %3088 = vmatprep.subr.bf16.mxu0 0
        %3089 = vmatpush1.bf16.msra.mxu0 %v2226
        %3090 = vmatprep.subr.bf16.mxu0 0
        %3091 = vmatpush1.bf16.msra.mxu0 %v2227
        %3092 = vmatprep.mubr.bf16.mxu0 %v927
        %3093 = vmatmul.mubr.bf16.gmra.mrb[0].mxu0 %v913
        %v3094 = vpop.f32.mrb[0].mxu0
        %v3095 = vadd.f32 %v3055, %v3094
        %v3096 = vpop.f32.mrb[0].mxu0
        %v3097 = vpop.f32.mrb[0].mxu0
        %v3098 = vpop.f32.mrb[0].mxu0
        %3099 = vdwg.mxu0
        %3100 = vmatprep.subr.bf16.mxu0 0
        %3101 = vmatpush1.bf16.msra.mxu0 %v2228
        %3102 = vmatprep.subr.bf16.mxu0 0
        %3103 = vmatpush1.bf16.msra.mxu0 %v2229
        %3104 = vmatprep.subr.bf16.mxu0 0
        %3105 = vmatpush1.bf16.msra.mxu0 %v2230
        %3106 = vmatprep.subr.bf16.mxu0 0
        %3107 = vmatpush1.bf16.msra.mxu0 %v2231
        %3108 = vmatprep.subr.bf16.mxu0 0
        %3109 = vmatpush1.bf16.msra.mxu0 %v2232
        %3110 = vmatprep.subr.bf16.mxu0 0
        %3111 = vmatpush1.bf16.msra.mxu0 %v2233
        %3112 = vmatprep.subr.bf16.mxu0 0
        %3113 = vmatpush1.bf16.msra.mxu0 %v2234
        %3114 = vmatprep.subr.bf16.mxu0 0
        %3115 = vmatpush1.bf16.msra.mxu0 %v2235
        %3116 = vmatprep.subr.bf16.mxu0 0
        %3117 = vmatpush1.bf16.msra.mxu0 %v2236
        %3118 = vmatprep.subr.bf16.mxu0 0
        %3119 = vmatpush1.bf16.msra.mxu0 %v2237
        %3120 = vmatprep.subr.bf16.mxu0 0
        %3121 = vmatpush1.bf16.msra.mxu0 %v2238
        %3122 = vmatprep.subr.bf16.mxu0 0
        %3123 = vmatpush1.bf16.msra.mxu0 %v2239
        %3124 = vmatprep.subr.bf16.mxu0 0
        %3125 = vmatpush1.bf16.msra.mxu0 %v2240
        %3126 = vmatprep.subr.bf16.mxu0 0
        %3127 = vmatpush1.bf16.msra.mxu0 %v2241
        %3128 = vmatprep.subr.bf16.mxu0 0
        %3129 = vmatpush1.bf16.msra.mxu0 %v2242
        %3130 = vmatprep.subr.bf16.mxu0 0
        %3131 = vmatpush1.bf16.msra.mxu0 %v2243
        %3132 = vmatprep.mubr.bf16.mxu0 %v931
        %3133 = vmatmul.mubr.bf16.gmra.mrb[0].mxu0 %v929
        %v3134 = vpop.f32.mrb[0].mxu0
        %v3135 = vadd.f32 %v3095, %v3134
        %v3136 = vpop.f32.mrb[0].mxu0
        %v3137 = vpop.f32.mrb[0].mxu0
        %v3138 = vpop.f32.mrb[0].mxu0
        %3139 = vdwg.mxu0
        %v3140 = vadd.f32 %v215, %v3135
        %3141 = vst [vmem:[#allocation2] sm:$0x3] %v3140
        %p3142 = scmp.eq.s32.totalorder %s20, 1
        // Predicated region
        $region37: #{alexnet_forward.3} parent=31 // pred_check
          %p3143 = pneg %p3142
        $region38: #{alexnet_forward.3} parent=31 // pred_check_branch
          %3145 = sbr.rel (%p3143) target = $region40
        $region39: #{alexnet_forward.3} parent=31 // pred_region
          %v3146 = vld [vmem:[#allocation2] sm:$0x3]
          %v3147 = vld [vmem:[%s2] sm:$0x1]
          %v3149 = vlaneseq
          %v3150 = vshrl.u32 %v3149, 7
          %v3151 = vsub.s32 0, %v3150
          %v3152 = vrot.slane %v3147, %v3151
          %v3154 = vadd.f32 %v3146, %v3152
          %3155 = vst [vmem:[#allocation3] sm:$0x3] %v3154
        $region40: #{alexnet_forward.3} parent=31 // pred_fallthru
          _
        // Predicated region
        $region41: #{alexnet_forward.3} parent=31 // pred_check
          %p3156 = pneg %p120
        $region42: #{alexnet_forward.3} parent=31 // pred_check_branch
          %3158 = sbr.rel (%p3156) target = $region44
        $region43: #{alexnet_forward.3} parent=31 // pred_region
          %s3160 = ssub.s32 32, 32
          %3161 = vsyncadd [#allocation4], %s3160
          %s3162 = smul.addr %s19, 32
          %s3163 = scalar_lea.hbm %s3, %s3162
          %s3165 = sshll.u32 [#allocation3], 4
          %s3166 = int_to_ptr.vmem [resolvable:$true] %s3165
          %3168 = dma.vmem_to_hbm [thread:$0]  %s3166, 32, %s3163, [#allocation4]
        $region44: #{alexnet_forward.3} parent=31 // pred_fallthru
          _
        // Predicated region
        $region45: #{alexnet_forward.3} parent=31 // pred_check
          %p3169 = pneg %p120
        $region46: #{alexnet_forward.3} parent=31 // pred_check_branch
          %3171 = sbr.rel (%p3169) target = $region48
        $region47: #{alexnet_forward.3} parent=31 // pred_region
          %3172 = dma.done [#allocation4], 32
        $region48: #{alexnet_forward.3} parent=31 // pred_fallthru
          _
      $region32: #{alexnet_forward.3} parent=5 // pred_fallthru
        _
      %p3173 = scmp.le.s32.totalorder 2, %s10
      // Predicated region
      $region49: #{alexnet_forward.3} parent=5 // pred_check
        %p3174 = pneg %p3173
      $region50: #{alexnet_forward.3} parent=5 // pred_check_branch
        %3176 = sbr.rel (%p3174) target = $region52
      $region51: #{alexnet_forward.3} parent=5 // pred_region
        %s3177 = ssub.s32 %s10, 2
      $region52: #{alexnet_forward.3} parent=5 // pred_fallthru
        _
    $region6: #{alexnet_forward.3} parent=1 // loop_footer
      %s14 = sadd.s32 1, %s10
    $region7: #{alexnet_forward.3} parent=1 // loop_footer_branch
      %9 = sbr.rel target = $region3
    $region8: #{alexnet_forward.3} parent=1 // loop_exit
      _
    %3178 = vsyncpa [#allocation4], 1
    %s3179 = scalar_lea.sflag [#allocation4], 1
    %3180 = vsyncpa %s3179, 1

</llo_original>
